<compile_context>
chip_gen: v5e
topology: v5e:2x2
jax: 0.10.0
libtpu: 0.0.40
codegen_flags: <defaults>
</compile_context>

<pallas_src>
import jax
import jax.numpy as jnp
from jax.experimental import pallas as pl
from jax.experimental.pallas import tpu as pltpu

_VMEM = pl.BlockSpec(memory_space=pltpu.MemorySpace.VMEM)
_BN_EPS = 1e-5
_NEG = -1e9  # "-inf" for the in-block maxpool; safe in bf16 and never overflows f32.


def _round_up(n, m):
    return ((n + m - 1) // m) * m


def _fold_bn(bias, bn):
    gamma, beta, mean, var = bn
    s = gamma / jnp.sqrt(var + _BN_EPS)
    return s, (bias - mean) * s + beta


def _pack_inception(q):
    """BN-fold an ImprovedInceptionBlock and lay branches+residual out as one
    (6*cin, 2C) matrix for a single fused wide-K matmul.
    Accumulator columns: [branch1 | branch2 | branch3 | branch4 | residual]."""
    cb, cin, _ = q["b1_w"].shape
    C = 4 * cb
    s1, f1 = _fold_bn(q["b1_b"], q["b1_bn"])
    s2, f2 = _fold_bn(q["b2_b"], q["b2_bn"])
    s3, f3 = _fold_bn(q["b3_b"], q["b3_bn"])
    s4, f4 = _fold_bn(q["b4_b"], q["b4_bn"])

    def col(w_k, s):  # torch (cb, cin) tap -> (cin, cb), BN scale folded
        return (w_k * s[:, None]).T

    g = jnp.zeros((6 * cin, 2 * C), jnp.float32)
    # tap 0: center (delta=0): branch1, branch2 t=1, branch3 t=1, residual 1x1
    g = g.at[0:cin, 0:cb].set(col(q["b1_w"][:, :, 0], s1))
    g = g.at[0:cin, cb:2 * cb].set(col(q["b2_w"][:, :, 1], s2))
    g = g.at[0:cin, 2 * cb:3 * cb].set(col(q["b3_w"][:, :, 1], s3))
    g = g.at[0:cin, C:2 * C].set(q["res_w"][:, :, 0].T)
    # tap 1: delta=-2 (branch3 t=0), tap 2: delta=-1 (branch2 t=0)
    g = g.at[cin:2 * cin, 2 * cb:3 * cb].set(col(q["b3_w"][:, :, 0], s3))
    g = g.at[2 * cin:3 * cin, cb:2 * cb].set(col(q["b2_w"][:, :, 0], s2))
    # tap 3: delta=+1 (branch2 t=2), tap 4: delta=+2 (branch3 t=2)
    g = g.at[3 * cin:4 * cin, cb:2 * cb].set(col(q["b2_w"][:, :, 2], s2))
    g = g.at[4 * cin:5 * cin, 2 * cb:3 * cb].set(col(q["b3_w"][:, :, 2], s3))
    # tap 5: maxpool(3,1,1)(x) -> branch4 1x1
    g = g.at[5 * cin:6 * cin, 3 * cb:4 * cb].set(col(q["b4_w"][:, :, 0], s4))

    shift = jnp.concatenate([f1, f2, f3, f4, q["res_b"]])
    se = q["se"]
    return dict(g=g, shift=shift,
                wse1=se["fc1_w"].T, bse1=se["fc1_b"],
                wse2=se["fc2_w"].T, bse2=se["fc2_b"])


def forward(x_ncl, p):
    """InceptionWithSE.forward (eval mode) as a single fused Pallas call.
    x_ncl: (B, 1, L) float32, PyTorch NCL layout."""
    B, cin0, L = x_ncl.shape
    assert cin0 == 1
    K = 5
    c1out = p["conv1_w"].shape[0]
    c2out = p["conv2_w"].shape[0]
    cin1 = p["inc1"]["b1_w"].shape[1]
    C1 = 4 * p["inc1"]["b1_w"].shape[0]
    cin2 = p["inc2"]["b1_w"].shape[1]
    C2 = 4 * p["inc2"]["b1_w"].shape[0]
    ncls = p["fc2_w"].shape[0]
    assert cin1 == c2out and cin2 == C1

    L1 = (L - 2 * (K - 1) - 1) // 2 + 1   # conv1 (k=5, s=2, dil=2)
    L2 = L1 // 2                          # maxpool(2)
    L3 = (L2 - 2 * (K - 1) - 1) // 2 + 1  # conv2 (k=5, s=2, dil=2)
    L4 = L3 // 2                          # maxpool(2) -> inception length
    J = L3 + K - 1                        # pool1-even rows consumed by conv2

    LB = max(_round_up(L4 + 2, 8), _round_up((J + 1) // 2, 8))  # per-sample inception rows
    JB = 2 * LB                                                 # per-sample stem rows
    N16 = B * LB
    N32 = B * JB
    assert JB >= J and LB >= L4 + 2

    # ---- stem im2col restricted to the conv1 rows that survive both pools ----
    x = x_ncl[:, 0, :].astype(jnp.float32)
    x_even = x[:, ::2]                    # stride-2 dilated stem only touches even inputs
    assert 4 * (J - 1) + 1 + (K - 1) < x_even.shape[1]
    assert 4 * (J - 1) + 1 < L1 and 2 * (J - 1) < L2
    rows = 4 * jnp.arange(J)[:, None] + jnp.arange(K)[None, :]
    x1a = x_even[:, rows]                 # conv1 rows 4j
    x1b = x_even[:, rows + 1]             # conv1 rows 4j+1

    def stack(z):
        z = jnp.pad(z, ((0, 0), (0, JB - J), (0, 0)))
        return z.reshape(B * JB, K)

    xstem = jnp.concatenate([stack(x1a), stack(x1b)], axis=0).astype(jnp.bfloat16)

    # ---- BN folding + packing every weight into one bf16 buffer, biases into one f32 ----
    s1c, f1c = _fold_bn(p["conv1_b"], p["conv1_bn"])
    w1 = (p["conv1_w"][:, 0, :] * s1c[:, None]).T                      # (K, 16)
    w2f = jnp.transpose(p["conv2_w"], (2, 1, 0)).reshape(K * c1out, c2out)  # (80, 32)
    i1 = _pack_inception(p["inc1"])
    i2 = _pack_inception(p["inc2"])
    sH, fH = _fold_bn(p["fc1_b"], p["bn1"])
    wfc1 = (p["fc1_w"] * sH[:, None]).T                                # (128, 64)
    wfc2 = p["fc2_w"].T                                                # (64, ncls)

    ii = jnp.arange(N16)
    valid = ((ii % LB) < L4).astype(jnp.float32)
    seg = jax.nn.one_hot(ii // LB, B, dtype=jnp.float32) * valid[:, None]  # (N16, B)
    segT = seg.T                                                           # (B, N16)

    wblocks = [("w1", w1), ("w2", w2f), ("g1", i1["g"]), ("g2", i2["g"]),
               ("wse11", i1["wse1"]), ("wse12", i1["wse2"]),
               ("wse21", i2["wse1"]), ("wse22", i2["wse2"]),
               ("wfc1", wfc1), ("wfc2", wfc2), ("segT", segT), ("seg", seg)]
    wwidth = max(a.shape[1] for _, a in wblocks)
    woff, parts, r = {}, [], 0
    for name, a in wblocks:
        h, w = a.shape
        woff[name] = (r, h, w)
        hp = _round_up(h, 16)
        parts.append(jnp.pad(a.astype(jnp.float32), ((0, hp - h), (0, wwidth - w))))
        r += hp
    wpack = jnp.concatenate(parts, axis=0).astype(jnp.bfloat16)

    brows = [("b1", f1c), ("b2", p["conv2_b"]), ("sh1", i1["shift"]),
             ("bse11", i1["bse1"]), ("bse12", i1["bse2"]), ("sh2", i2["shift"]),
             ("bse21", i2["bse1"]), ("bse22", i2["bse2"]), ("bfc1", fH),
             ("bfc2", p["fc2_b"])]
    bwidth = max(v.shape[0] for _, v in brows)
    bpack = jnp.stack([jnp.pad(v.astype(jnp.float32), (0, bwidth - v.shape[0]))
                       for _, v in brows])
    boff = {name: (idx, v.shape[0]) for idx, (name, v) in enumerate(brows)}

    inv_L4 = 1.0 / L4
    bf16 = jnp.bfloat16
    f32 = jnp.float32

    def wsl(ref, name):
        r0, h, w = woff[name]
        return ref[r0:r0 + h, 0:w]

    def bsl(ref, name):
        r0, n = boff[name]
        return ref[r0:r0 + 1, 0:n]

    def kernel(xstem_ref, w_ref, b_ref, out_ref,
               s_p1e, xw_c2, s_c2, s_in1, xw_i1, s_in2, xw_i2):
        # Row-classification masks (f32 iota arithmetic; no integer div/mod on vectors).
        ib = jax.lax.broadcasted_iota(jnp.int32, (N16 + 8, 1), 0).astype(f32)
        posb = ib - jnp.floor(ib * (1.0 / LB) + 1e-6) * LB
        is_data = jnp.logical_and(jnp.logical_and(posb > 1.5, posb < L4 + 1.5),
                                  ib < N16 - 0.5)
        hneg = jnp.where(is_data, 0.0, _NEG)                      # (N16+8, 1) buffer-row mask
        io = jax.lax.broadcasted_iota(jnp.int32, (N16, 1), 0).astype(f32)
        poso = io - jnp.floor(io * (1.0 / LB) + 1e-6) * LB
        valid_o = poso < (L4 - 0.5)                               # (N16, 1) valid output rows

        # Zero the halo'd activation scratches (zero-padding for the shifted-tap convs).
        s_p1e[...] = jnp.zeros_like(s_p1e)
        s_in1[...] = jnp.zeros_like(s_in1)
        s_in2[...] = jnp.zeros_like(s_in2)

        # ---- stem: conv1 + BN + relu (both stride parities in ONE matmul), then pool1 ----
        c_ab = jnp.maximum(
            jnp.dot(xstem_ref[...], wsl(w_ref, "w1"), preferred_element_type=f32)
            + bsl(b_ref, "b1"), 0.0)
        s_p1e[0:N32, :] = jnp.maximum(c_ab[0:N32], c_ab[N32:2 * N32])

        # ---- conv2 + relu: 5 shifted taps fused into one K = 5*16 contraction ----
        for k in range(K):
            xw_c2[:, k * c1out:(k + 1) * c1out] = s_p1e[k:k + N32, :].astype(bf16)
        c2 = jnp.dot(xw_c2[...], wsl(w_ref, "w2"), preferred_element_type=f32) \
            + bsl(b_ref, "b2")
        s_c2[...] = jnp.maximum(c2, 0.0)

        # ---- maxpool(2,2): stride-2 sublane reads (no one-hot select matmul) ----
        x0 = jnp.maximum(s_c2[pl.ds(0, N16, stride=2), :],
                         s_c2[pl.ds(1, N16, stride=2), :])
        s_in1[2:2 + N16, :] = jnp.where(valid_o, x0, 0.0)

        def inception(s_in, xw, cin, C, gname, shname, w1n, b1n, w2n, b2n):
            # Build (N16, 6*cin) wide operand from shifted slices of the halo'd scratch.
            xc = s_in[2:2 + N16, 0:cin]
            xm2 = s_in[0:N16, 0:cin]
            xm1 = s_in[1:1 + N16, 0:cin]
            xp1 = s_in[3:3 + N16, 0:cin]
            xp2 = s_in[4:4 + N16, 0:cin]
            pooled = jnp.maximum(
                jnp.maximum(xm1 + hneg[1:1 + N16], xc + hneg[2:2 + N16]),
                xp1 + hneg[3:3 + N16])                     # maxpool(3,1,1) with -inf at halos
            xw[:, 0 * cin:1 * cin] = xc.astype(bf16)
            xw[:, 1 * cin:2 * cin] = xm2.astype(bf16)
            xw[:, 2 * cin:3 * cin] = xm1.astype(bf16)
            xw[:, 3 * cin:4 * cin] = xp1.astype(bf16)
            xw[:, 4 * cin:5 * cin] = xp2.astype(bf16)
            xw[:, 5 * cin:6 * cin] = pooled.astype(bf16)
            acc = jnp.dot(xw[...], wsl(w_ref, gname), preferred_element_type=f32) \
                + bsl(b_ref, shname)                       # (N16, 2C)
            branches = jnp.maximum(acc[:, :C], 0.0)
            resid = acc[:, C:]
            # Batched squeeze-excite: per-sample mean / FCs / gate via segment matmuls.
            se_in = jnp.dot(wsl(w_ref, "segT"), branches.astype(bf16),
                            preferred_element_type=f32) * inv_L4          # (B, C)
            h = jnp.maximum(
                jnp.dot(se_in.astype(bf16), wsl(w_ref, w1n), preferred_element_type=f32)
                + bsl(b_ref, b1n), 0.0)
            z = jnp.dot(h.astype(bf16), wsl(w_ref, w2n), preferred_element_type=f32) \
                + bsl(b_ref, b2n)
            gate = 1.0 / (1.0 + jnp.exp(-z))                              # (B, C)
            gate_full = jnp.dot(wsl(w_ref, "seg"), gate.astype(bf16),
                                preferred_element_type=f32)               # (N16, C)
            return jnp.where(valid_o, branches * gate_full + resid, 0.0)

        y1 = inception(s_in1, xw_i1, cin1, C1, "g1", "sh1", "wse11", "bse11", "wse12", "bse12")
        s_in2[2:2 + N16, :] = y1
        y2 = inception(s_in2, xw_i2, cin2, C2, "g2", "sh2", "wse21", "bse21", "wse22", "bse22")

        # ---- global average pool + fc1(+BN)+relu + fc2 + log_softmax ----
        feat = jnp.dot(wsl(w_ref, "segT"), y2.astype(bf16),
                       preferred_element_type=f32) * inv_L4               # (B, 128)
        hid = jnp.maximum(
            jnp.dot(feat.astype(bf16), wsl(w_ref, "wfc1"), preferred_element_type=f32)
            + bsl(b_ref, "bfc1"), 0.0)
        # TODO(synk): Dropout(p=0.3) is identity in eval mode; omitted.
        logits = jnp.dot(hid.astype(bf16), wsl(w_ref, "wfc2"), preferred_element_type=f32) \
            + bsl(b_ref, "bfc2")
        m = jnp.max(logits, axis=-1, keepdims=True)
        lse = jnp.log(jnp.sum(jnp.exp(logits - m), axis=-1, keepdims=True))
        out_ref[...] = (logits - m) - lse

    return pl.pallas_call(
        kernel,
        out_shape=jax.ShapeDtypeStruct((B, ncls), jnp.float32),
        in_specs=[_VMEM, _VMEM, _VMEM],
        out_specs=_VMEM,
        scratch_shapes=[
            pltpu.VMEM((N32 + 8, c1out), jnp.float32),     # pool1-even (zero-halo'd)
            pltpu.VMEM((N32, K * c1out), jnp.bfloat16),    # conv2 wide operand
            pltpu.VMEM((N32, c2out), jnp.float32),         # conv2 output (for stride-2 pool)
            pltpu.VMEM((N16 + 8, cin1), jnp.float32),      # inception1 input (zero-halo'd)
            pltpu.VMEM((N16, 6 * cin1), jnp.bfloat16),     # inception1 wide operand
            pltpu.VMEM((N16 + 8, cin2), jnp.float32),      # inception2 input (zero-halo'd)
            pltpu.VMEM((N16, 6 * cin2), jnp.bfloat16),     # inception2 wide operand
        ],
    )(xstem, wpack, bpack)


# --------------------------------------------------------------------------------------
# Deterministic parameter initialization (shapes from the PyTorch __init__)
# --------------------------------------------------------------------------------------

def init_params(key, num_classes=2):
    keys = iter(jax.random.split(key, 128))

    def nrm(shape, scale=0.1):
        return scale * jax.random.normal(next(keys), shape, jnp.float32)

    def conv_p(cout, cin, k):
        return nrm((cout, cin, k)), nrm((cout,))

    def bn_p(c):
        gamma = 1.0 + nrm((c,))
        beta = nrm((c,))
        running_mean = nrm((c,))
        running_var = 1.0 + 0.1 * jax.random.uniform(next(keys), (c,), jnp.float32)
        return (gamma, beta, running_mean, running_var)

    def lin_p(out_d, in_d):
        return nrm((out_d, in_d)), nrm((out_d,))

    def inception_p(cin, o1, o3, od, op):
        cout = o1 + o3 + od + op
        q = {}
        q["b1_w"], q["b1_b"] = conv_p(o1, cin, 1); q["b1_bn"] = bn_p(o1)
        q["b2_w"], q["b2_b"] = conv_p(o3, cin, 3); q["b2_bn"] = bn_p(o3)
        q["b3_w"], q["b3_b"] = conv_p(od, cin, 3); q["b3_bn"] = bn_p(od)
        q["b4_w"], q["b4_b"] = conv_p(op, cin, 1); q["b4_bn"] = bn_p(op)
        q["res_w"], q["res_b"] = conv_p(cout, cin, 1)
        red = cout // 16
        se = {}
        se["fc1_w"], se["fc1_b"] = lin_p(red, cout)
        se["fc2_w"], se["fc2_b"] = lin_p(cout, red)
        q["se"] = se
        return q

    params = {}
    params["conv1_w"], params["conv1_b"] = conv_p(16, 1, 5)
    params["conv1_bn"] = bn_p(16)
    params["conv2_w"], params["conv2_b"] = conv_p(32, 16, 5)
    params["inc1"] = inception_p(32, 16, 16, 16, 16)
    params["inc2"] = inception_p(64, 32, 32, 32, 32)
    params["fc1_w"], params["fc1_b"] = lin_p(64, 128)
    params["bn1"] = bn_p(64)
    params["fc2_w"], params["fc2_b"] = lin_p(num_classes, 64)
    return params


# --------------------------------------------------------------------------------------
if __name__ == "__main__":
    key = jax.random.PRNGKey(0)
    pkey, xkey = jax.random.split(key)
    params = init_params(pkey, num_classes=2)
    # Input consistent with Conv1d(in_channels=1): (batch=2, channels=1, length=256)
    x = jax.random.normal(xkey, (2, 1, 256), jnp.float32)
    out = jax.jit(forward)(x, params)
    out = jax.block_until_ready(out)
    assert out.shape == (2, 2)
    assert bool(jnp.all(jnp.isfinite(out)))
    print("KERNEL_OK")
</pallas_src>

<mosaic_0001>
module attributes {stable_mosaic.version = 11 : i64} {
  func.func @kernel(%arg0: memref<128x5xbf16, #tpu.memory_space<vmem>>, %arg1: memref<1136x256xbf16, #tpu.memory_space<vmem>>, %arg2: memref<10x256xf32, #tpu.memory_space<vmem>>, %arg3: memref<2x2xf32, #tpu.memory_space<vmem>>, %arg4: memref<72x16xf32, #tpu.memory_space<vmem>>, %arg5: memref<64x80xbf16, #tpu.memory_space<vmem>>, %arg6: memref<64x32xf32, #tpu.memory_space<vmem>>, %arg7: memref<40x32xf32, #tpu.memory_space<vmem>>, %arg8: memref<32x192xbf16, #tpu.memory_space<vmem>>, %arg9: memref<40x64xf32, #tpu.memory_space<vmem>>, %arg10: memref<32x384xbf16, #tpu.memory_space<vmem>>) attributes {dimension_semantics = [], scalar_prefetch = 0 : i64, scratch_operands = 7 : i64, tpu.core_type = #tpu.core_type<tc>} {
    %0 = tpu.iota {dimensions = array<i32: 0>} : vector<40x1xi32>
    %1 = arith.sitofp %0 : vector<40x1xi32> to vector<40x1xf32>
    %cst = arith.constant 6.250000e-02 : f32
    %2 = vector.broadcast %cst : f32 to vector<40x1xf32>
    %3 = arith.mulf %1, %2 : vector<40x1xf32>
    %cst_0 = arith.constant 9.99999997E-7 : f32
    %4 = vector.broadcast %cst_0 : f32 to vector<40x1xf32>
    %5 = arith.addf %3, %4 : vector<40x1xf32>
    %6 = math.floor %5 : vector<40x1xf32>
    %cst_1 = arith.constant 1.600000e+01 : f32
    %7 = vector.broadcast %cst_1 : f32 to vector<40x1xf32>
    %8 = arith.mulf %6, %7 : vector<40x1xf32>
    %9 = arith.subf %1, %8 : vector<40x1xf32>
    %cst_2 = arith.constant 1.500000e+00 : f32
    %10 = vector.broadcast %cst_2 : f32 to vector<40x1xf32>
    %11 = arith.cmpf ogt, %9, %10 : vector<40x1xf32>
    %cst_3 = arith.constant 1.450000e+01 : f32
    %12 = vector.broadcast %cst_3 : f32 to vector<40x1xf32>
    %13 = arith.cmpf olt, %9, %12 : vector<40x1xf32>
    %14 = arith.andi %11, %13 : vector<40x1xi1>
    %cst_4 = arith.constant 3.150000e+01 : f32
    %15 = vector.broadcast %cst_4 : f32 to vector<40x1xf32>
    %16 = arith.cmpf olt, %1, %15 : vector<40x1xf32>
    %17 = arith.andi %14, %16 : vector<40x1xi1>
    %cst_5 = arith.constant 0.000000e+00 : f32
    %cst_6 = arith.constant -1.000000e+09 : f32
    %18 = vector.broadcast %cst_5 : f32 to vector<40x1xf32>
    %19 = vector.broadcast %cst_6 : f32 to vector<40x1xf32>
    %20 = arith.select %17, %18, %19 : vector<40x1xi1>, vector<40x1xf32>
    %21 = tpu.iota {dimensions = array<i32: 0>} : vector<32x1xi32>
    %22 = arith.sitofp %21 : vector<32x1xi32> to vector<32x1xf32>
    %cst_7 = arith.constant 6.250000e-02 : f32
    %23 = vector.broadcast %cst_7 : f32 to vector<32x1xf32>
    %24 = arith.mulf %22, %23 : vector<32x1xf32>
    %cst_8 = arith.constant 9.99999997E-7 : f32
    %25 = vector.broadcast %cst_8 : f32 to vector<32x1xf32>
    %26 = arith.addf %24, %25 : vector<32x1xf32>
    %27 = math.floor %26 : vector<32x1xf32>
    %cst_9 = arith.constant 1.600000e+01 : f32
    %28 = vector.broadcast %cst_9 : f32 to vector<32x1xf32>
    %29 = arith.mulf %27, %28 : vector<32x1xf32>
    %30 = arith.subf %22, %29 : vector<32x1xf32>
    %cst_10 = arith.constant 1.250000e+01 : f32
    %31 = vector.broadcast %cst_10 : f32 to vector<32x1xf32>
    %32 = arith.cmpf olt, %30, %31 : vector<32x1xf32>
    %cst_11 = arith.constant 0.000000e+00 : f32
    %33 = vector.broadcast %cst_11 : f32 to vector<72x16xf32>
    %c0 = arith.constant 0 : index
    %c0_12 = arith.constant 0 : index
    %34 = vector.load %arg4[%c0, %c0_12] : memref<72x16xf32, #tpu.memory_space<vmem>>, vector<72x16xf32>
    tpu.vector_store %arg4[%c0, %c0_12], %33 {strides = array<i32>} : memref<72x16xf32, #tpu.memory_space<vmem>>, vector<72x16xf32>,
    %cst_13 = arith.constant 0.000000e+00 : f32
    %35 = vector.broadcast %cst_13 : f32 to vector<40x32xf32>
    %c0_14 = arith.constant 0 : index
    %c0_15 = arith.constant 0 : index
    %36 = vector.load %arg7[%c0_14, %c0_15] : memref<40x32xf32, #tpu.memory_space<vmem>>, vector<40x32xf32>
    tpu.vector_store %arg7[%c0_14, %c0_15], %35 {strides = array<i32>} : memref<40x32xf32, #tpu.memory_space<vmem>>, vector<40x32xf32>,
    %cst_16 = arith.constant 0.000000e+00 : f32
    %37 = vector.broadcast %cst_16 : f32 to vector<40x64xf32>
    %c0_17 = arith.constant 0 : index
    %c0_18 = arith.constant 0 : index
    %38 = vector.load %arg9[%c0_17, %c0_18] : memref<40x64xf32, #tpu.memory_space<vmem>>, vector<40x64xf32>
    tpu.vector_store %arg9[%c0_17, %c0_18], %37 {strides = array<i32>} : memref<40x64xf32, #tpu.memory_space<vmem>>, vector<40x64xf32>,
    %c0_19 = arith.constant 0 : index
    %c0_20 = arith.constant 0 : index
    %39 = vector.load %arg0[%c0_19, %c0_20] : memref<128x5xbf16, #tpu.memory_space<vmem>>, vector<128x5xbf16>
    %c0_21 = arith.constant 0 : index
    %c0_22 = arith.constant 0 : index
    %40 = vector.load %arg1[%c0_21, %c0_22] : memref<1136x256xbf16, #tpu.memory_space<vmem>>, vector<5x16xbf16>
    %cst_23 = arith.constant dense<0.000000e+00> : vector<128x16xf32>
    %41 = tpu.matmul %39, %40, %cst_23 {dimension_numbers = #tpu.dot_dimension_numbers<[1], [0], [0], [1], [0, 0, 1, 1], [], []>} : vector<128x5xbf16>, vector<5x16xbf16>, vector<128x16xf32> -> vector<128x16xf32>
    %c0_24 = arith.constant 0 : index
    %c0_25 = arith.constant 0 : index
    %42 = vector.load %arg2[%c0_24, %c0_25] : memref<10x256xf32, #tpu.memory_space<vmem>>, vector<1x16xf32>
    %43 = vector.broadcast %42 : vector<1x16xf32> to vector<128x16xf32>
    %44 = arith.addf %41, %43 : vector<128x16xf32>
    %cst_26 = arith.constant 0.000000e+00 : f32
    %45 = vector.broadcast %cst_26 : f32 to vector<128x16xf32>
    %46 = arith.maximumf %44, %45 : vector<128x16xf32>
    %47 = vector.extract_strided_slice %46 {offsets = [0, 0], sizes = [64, 16], strides = [1, 1]} : vector<128x16xf32> to vector<64x16xf32>
    %48 = vector.extract_strided_slice %46 {offsets = [64, 0], sizes = [64, 16], strides = [1, 1]} : vector<128x16xf32> to vector<64x16xf32>
    %49 = arith.maximumf %47, %48 : vector<64x16xf32>
    %c0_27 = arith.constant 0 : index
    %c0_28 = arith.constant 0 : index
    %50 = vector.load %arg4[%c0_27, %c0_28] : memref<72x16xf32, #tpu.memory_space<vmem>>, vector<64x16xf32>
    tpu.vector_store %arg4[%c0_27, %c0_28], %49 {strides = array<i32>} : memref<72x16xf32, #tpu.memory_space<vmem>>, vector<64x16xf32>,
    %c0_29 = arith.constant 0 : index
    %c0_30 = arith.constant 0 : index
    %51 = vector.load %arg4[%c0_29, %c0_30] : memref<72x16xf32, #tpu.memory_space<vmem>>, vector<64x16xf32>
    %52 = arith.truncf %51 : vector<64x16xf32> to vector<64x16xbf16>
    %c0_31 = arith.constant 0 : index
    %c0_32 = arith.constant 0 : index
    %53 = vector.load %arg5[%c0_31, %c0_32] : memref<64x80xbf16, #tpu.memory_space<vmem>>, vector<64x16xbf16>
    tpu.vector_store %arg5[%c0_31, %c0_32], %52 {strides = array<i32>} : memref<64x80xbf16, #tpu.memory_space<vmem>>, vector<64x16xbf16>,
    %c1 = arith.constant 1 : index
    %c0_33 = arith.constant 0 : index
    %54 = vector.load %arg4[%c1, %c0_33] : memref<72x16xf32, #tpu.memory_space<vmem>>, vector<64x16xf32>
    %55 = arith.truncf %54 : vector<64x16xf32> to vector<64x16xbf16>
    %c0_34 = arith.constant 0 : index
    %c16 = arith.constant 16 : index
    %56 = vector.load %arg5[%c0_34, %c16] : memref<64x80xbf16, #tpu.memory_space<vmem>>, vector<64x16xbf16>
    tpu.vector_store %arg5[%c0_34, %c16], %55 {strides = array<i32>} : memref<64x80xbf16, #tpu.memory_space<vmem>>, vector<64x16xbf16>,
    %c2 = arith.constant 2 : index
    %c0_35 = arith.constant 0 : index
    %57 = vector.load %arg4[%c2, %c0_35] : memref<72x16xf32, #tpu.memory_space<vmem>>, vector<64x16xf32>
    %58 = arith.truncf %57 : vector<64x16xf32> to vector<64x16xbf16>
    %c0_36 = arith.constant 0 : index
    %c32 = arith.constant 32 : index
    %59 = vector.load %arg5[%c0_36, %c32] : memref<64x80xbf16, #tpu.memory_space<vmem>>, vector<64x16xbf16>
    tpu.vector_store %arg5[%c0_36, %c32], %58 {strides = array<i32>} : memref<64x80xbf16, #tpu.memory_space<vmem>>, vector<64x16xbf16>,
    %c3 = arith.constant 3 : index
    %c0_37 = arith.constant 0 : index
    %60 = vector.load %arg4[%c3, %c0_37] : memref<72x16xf32, #tpu.memory_space<vmem>>, vector<64x16xf32>
    %61 = arith.truncf %60 : vector<64x16xf32> to vector<64x16xbf16>
    %c0_38 = arith.constant 0 : index
    %c48 = arith.constant 48 : index
    %62 = vector.load %arg5[%c0_38, %c48] : memref<64x80xbf16, #tpu.memory_space<vmem>>, vector<64x16xbf16>
    tpu.vector_store %arg5[%c0_38, %c48], %61 {strides = array<i32>} : memref<64x80xbf16, #tpu.memory_space<vmem>>, vector<64x16xbf16>,
    %c4 = arith.constant 4 : index
    %c0_39 = arith.constant 0 : index
    %63 = vector.load %arg4[%c4, %c0_39] : memref<72x16xf32, #tpu.memory_space<vmem>>, vector<64x16xf32>
    %64 = arith.truncf %63 : vector<64x16xf32> to vector<64x16xbf16>
    %c0_40 = arith.constant 0 : index
    %c64 = arith.constant 64 : index
    %65 = vector.load %arg5[%c0_40, %c64] : memref<64x80xbf16, #tpu.memory_space<vmem>>, vector<64x16xbf16>
    tpu.vector_store %arg5[%c0_40, %c64], %64 {strides = array<i32>} : memref<64x80xbf16, #tpu.memory_space<vmem>>, vector<64x16xbf16>,
    %c0_41 = arith.constant 0 : index
    %c0_42 = arith.constant 0 : index
    %66 = vector.load %arg5[%c0_41, %c0_42] : memref<64x80xbf16, #tpu.memory_space<vmem>>, vector<64x80xbf16>
    %c16_43 = arith.constant 16 : index
    %c0_44 = arith.constant 0 : index
    %67 = vector.load %arg1[%c16_43, %c0_44] : memref<1136x256xbf16, #tpu.memory_space<vmem>>, vector<80x32xbf16>
    %cst_45 = arith.constant dense<0.000000e+00> : vector<64x32xf32>
    %68 = tpu.matmul %66, %67, %cst_45 {dimension_numbers = #tpu.dot_dimension_numbers<[1], [0], [0], [1], [0, 0, 1, 1], [], []>} : vector<64x80xbf16>, vector<80x32xbf16>, vector<64x32xf32> -> vector<64x32xf32>
    %c1_46 = arith.constant 1 : index
    %c0_47 = arith.constant 0 : index
    %69 = vector.load %arg2[%c1_46, %c0_47] : memref<10x256xf32, #tpu.memory_space<vmem>>, vector<1x32xf32>
    %70 = vector.broadcast %69 : vector<1x32xf32> to vector<64x32xf32>
    %71 = arith.addf %68, %70 : vector<64x32xf32>
    %cst_48 = arith.constant 0.000000e+00 : f32
    %72 = vector.broadcast %cst_48 : f32 to vector<64x32xf32>
    %73 = arith.maximumf %71, %72 : vector<64x32xf32>
    %c0_49 = arith.constant 0 : index
    %c0_50 = arith.constant 0 : index
    %74 = vector.load %arg6[%c0_49, %c0_50] : memref<64x32xf32, #tpu.memory_space<vmem>>, vector<64x32xf32>
    tpu.vector_store %arg6[%c0_49, %c0_50], %73 {strides = array<i32>} : memref<64x32xf32, #tpu.memory_space<vmem>>, vector<64x32xf32>,
    %c0_51 = arith.constant 0 : index
    %c0_52 = arith.constant 0 : index
    %75 = tpu.strided_load %arg6[%c0_51, %c0_52] {strides = array<i32: 2, 1>} : memref<64x32xf32, #tpu.memory_space<vmem>>, vector<32x32xf32>
    %c1_53 = arith.constant 1 : index
    %c0_54 = arith.constant 0 : index
    %76 = tpu.strided_load %arg6[%c1_53, %c0_54] {strides = array<i32: 2, 1>} : memref<64x32xf32, #tpu.memory_space<vmem>>, vector<32x32xf32>
    %77 = arith.maximumf %75, %76 : vector<32x32xf32>
    %cst_55 = arith.constant 0.000000e+00 : f32
    %78 = vector.shape_cast %32 : vector<32x1xi1> to vector<32x1xi1>
    %79 = vector.broadcast %78 : vector<32x1xi1> to vector<32x32xi1>
    %80 = vector.broadcast %cst_55 : f32 to vector<32x32xf32>
    %81 = arith.select %79, %77, %80 : vector<32x32xi1>, vector<32x32xf32>
    %c2_56 = arith.constant 2 : index
    %c0_57 = arith.constant 0 : index
    %82 = vector.load %arg7[%c2_56, %c0_57] : memref<40x32xf32, #tpu.memory_space<vmem>>, vector<32x32xf32>
    tpu.vector_store %arg7[%c2_56, %c0_57], %81 {strides = array<i32>} : memref<40x32xf32, #tpu.memory_space<vmem>>, vector<32x32xf32>,
    %c2_58 = arith.constant 2 : index
    %c0_59 = arith.constant 0 : index
    %83 = vector.load %arg7[%c2_58, %c0_59] : memref<40x32xf32, #tpu.memory_space<vmem>>, vector<32x32xf32>
    %c0_60 = arith.constant 0 : index
    %c0_61 = arith.constant 0 : index
    %84 = vector.load %arg7[%c0_60, %c0_61] : memref<40x32xf32, #tpu.memory_space<vmem>>, vector<32x32xf32>
    %c1_62 = arith.constant 1 : index
    %c0_63 = arith.constant 0 : index
    %85 = vector.load %arg7[%c1_62, %c0_63] : memref<40x32xf32, #tpu.memory_space<vmem>>, vector<32x32xf32>
    %c3_64 = arith.constant 3 : index
    %c0_65 = arith.constant 0 : index
    %86 = vector.load %arg7[%c3_64, %c0_65] : memref<40x32xf32, #tpu.memory_space<vmem>>, vector<32x32xf32>
    %c4_66 = arith.constant 4 : index
    %c0_67 = arith.constant 0 : index
    %87 = vector.load %arg7[%c4_66, %c0_67] : memref<40x32xf32, #tpu.memory_space<vmem>>, vector<32x32xf32>
    %88 = vector.extract_strided_slice %20 {offsets = [1, 0], sizes = [32, 1], strides = [1, 1]} : vector<40x1xf32> to vector<32x1xf32>
    %89 = vector.broadcast %88 : vector<32x1xf32> to vector<32x32xf32>
    %90 = arith.addf %85, %89 : vector<32x32xf32>
    %91 = vector.extract_strided_slice %20 {offsets = [2, 0], sizes = [32, 1], strides = [1, 1]} : vector<40x1xf32> to vector<32x1xf32>
    %92 = vector.broadcast %91 : vector<32x1xf32> to vector<32x32xf32>
    %93 = arith.addf %83, %92 : vector<32x32xf32>
    %94 = arith.maximumf %90, %93 : vector<32x32xf32>
    %95 = vector.extract_strided_slice %20 {offsets = [3, 0], sizes = [32, 1], strides = [1, 1]} : vector<40x1xf32> to vector<32x1xf32>
    %96 = vector.broadcast %95 : vector<32x1xf32> to vector<32x32xf32>
    %97 = arith.addf %86, %96 : vector<32x32xf32>
    %98 = arith.maximumf %94, %97 : vector<32x32xf32>
    %99 = arith.truncf %83 : vector<32x32xf32> to vector<32x32xbf16>
    %c0_68 = arith.constant 0 : index
    %c0_69 = arith.constant 0 : index
    %100 = vector.load %arg8[%c0_68, %c0_69] : memref<32x192xbf16, #tpu.memory_space<vmem>>, vector<32x32xbf16>
    tpu.vector_store %arg8[%c0_68, %c0_69], %99 {strides = array<i32>} : memref<32x192xbf16, #tpu.memory_space<vmem>>, vector<32x32xbf16>,
    %101 = arith.truncf %84 : vector<32x32xf32> to vector<32x32xbf16>
    %c0_70 = arith.constant 0 : index
    %c32_71 = arith.constant 32 : index
    %102 = vector.load %arg8[%c0_70, %c32_71] : memref<32x192xbf16, #tpu.memory_space<vmem>>, vector<32x32xbf16>
    tpu.vector_store %arg8[%c0_70, %c32_71], %101 {strides = array<i32>} : memref<32x192xbf16, #tpu.memory_space<vmem>>, vector<32x32xbf16>,
    %103 = arith.truncf %85 : vector<32x32xf32> to vector<32x32xbf16>
    %c0_72 = arith.constant 0 : index
    %c64_73 = arith.constant 64 : index
    %104 = vector.load %arg8[%c0_72, %c64_73] : memref<32x192xbf16, #tpu.memory_space<vmem>>, vector<32x32xbf16>
    tpu.vector_store %arg8[%c0_72, %c64_73], %103 {strides = array<i32>} : memref<32x192xbf16, #tpu.memory_space<vmem>>, vector<32x32xbf16>,
    %105 = arith.truncf %86 : vector<32x32xf32> to vector<32x32xbf16>
    %c0_74 = arith.constant 0 : index
    %c96 = arith.constant 96 : index
    %106 = vector.load %arg8[%c0_74, %c96] : memref<32x192xbf16, #tpu.memory_space<vmem>>, vector<32x32xbf16>
    tpu.vector_store %arg8[%c0_74, %c96], %105 {strides = array<i32>} : memref<32x192xbf16, #tpu.memory_space<vmem>>, vector<32x32xbf16>,
    %107 = arith.truncf %87 : vector<32x32xf32> to vector<32x32xbf16>
    %c0_75 = arith.constant 0 : index
    %c128 = arith.constant 128 : index
    %108 = vector.load %arg8[%c0_75, %c128] : memref<32x192xbf16, #tpu.memory_space<vmem>>, vector<32x32xbf16>
    tpu.vector_store %arg8[%c0_75, %c128], %107 {strides = array<i32>} : memref<32x192xbf16, #tpu.memory_space<vmem>>, vector<32x32xbf16>,
    %109 = arith.truncf %98 : vector<32x32xf32> to vector<32x32xbf16>
    %c0_76 = arith.constant 0 : index
    %c160 = arith.constant 160 : index
    %110 = vector.load %arg8[%c0_76, %c160] : memref<32x192xbf16, #tpu.memory_space<vmem>>, vector<32x32xbf16>
    tpu.vector_store %arg8[%c0_76, %c160], %109 {strides = array<i32>} : memref<32x192xbf16, #tpu.memory_space<vmem>>, vector<32x32xbf16>,
    %c0_77 = arith.constant 0 : index
    %c0_78 = arith.constant 0 : index
    %111 = vector.load %arg8[%c0_77, %c0_78] : memref<32x192xbf16, #tpu.memory_space<vmem>>, vector<32x192xbf16>
    %c96_79 = arith.constant 96 : index
    %c0_80 = arith.constant 0 : index
    %112 = vector.load %arg1[%c96_79, %c0_80] : memref<1136x256xbf16, #tpu.memory_space<vmem>>, vector<192x128xbf16>
    %cst_81 = arith.constant dense<0.000000e+00> : vector<32x128xf32>
    %113 = tpu.matmul %111, %112, %cst_81 {dimension_numbers = #tpu.dot_dimension_numbers<[1], [0], [0], [1], [0, 0, 1, 1], [], []>} : vector<32x192xbf16>, vector<192x128xbf16>, vector<32x128xf32> -> vector<32x128xf32>
    %c2_82 = arith.constant 2 : index
    %c0_83 = arith.constant 0 : index
    %114 = vector.load %arg2[%c2_82, %c0_83] : memref<10x256xf32, #tpu.memory_space<vmem>>, vector<1x128xf32>
    %115 = vector.broadcast %114 : vector<1x128xf32> to vector<32x128xf32>
    %116 = arith.addf %113, %115 : vector<32x128xf32>
    %117 = vector.extract_strided_slice %116 {offsets = [0, 0], sizes = [32, 64], strides = [1, 1]} : vector<32x128xf32> to vector<32x64xf32>
    %cst_84 = arith.constant 0.000000e+00 : f32
    %118 = vector.broadcast %cst_84 : f32 to vector<32x64xf32>
    %119 = arith.maximumf %117, %118 : vector<32x64xf32>
    %120 = vector.extract_strided_slice %116 {offsets = [0, 64], sizes = [32, 64], strides = [1, 1]} : vector<32x128xf32> to vector<32x64xf32>
    %c1088 = arith.constant 1088 : index
    %c0_85 = arith.constant 0 : index
    %121 = vector.load %arg1[%c1088, %c0_85] : memref<1136x256xbf16, #tpu.memory_space<vmem>>, vector<2x32xbf16>
    %122 = arith.truncf %119 : vector<32x64xf32> to vector<32x64xbf16>
    %cst_86 = arith.constant dense<0.000000e+00> : vector<2x64xf32>
    %123 = tpu.matmul %121, %122, %cst_86 {dimension_numbers = #tpu.dot_dimension_numbers<[1], [0], [0], [1], [0, 0, 1, 1], [], []>} : vector<2x32xbf16>, vector<32x64xbf16>, vector<2x64xf32> -> vector<2x64xf32>
    %cst_87 = arith.constant 0.0769230798 : f32
    %124 = vector.broadcast %cst_87 : f32 to vector<2x64xf32>
    %125 = arith.mulf %123, %124 : vector<2x64xf32>
    %126 = arith.truncf %125 : vector<2x64xf32> to vector<2x64xbf16>
    %c672 = arith.constant 672 : index
    %c0_88 = arith.constant 0 : index
    %127 = vector.load %arg1[%c672, %c0_88] : memref<1136x256xbf16, #tpu.memory_space<vmem>>, vector<64x4xbf16>
    %cst_89 = arith.constant dense<0.000000e+00> : vector<2x4xf32>
    %128 = tpu.matmul %126, %127, %cst_89 {dimension_numbers = #tpu.dot_dimension_numbers<[1], [0], [0], [1], [0, 0, 1, 1], [], []>} : vector<2x64xbf16>, vector<64x4xbf16>, vector<2x4xf32> -> vector<2x4xf32>
    %c3_90 = arith.constant 3 : index
    %c0_91 = arith.constant 0 : index
    %129 = vector.load %arg2[%c3_90, %c0_91] : memref<10x256xf32, #tpu.memory_space<vmem>>, vector<1x4xf32>
    %130 = vector.broadcast %129 : vector<1x4xf32> to vector<2x4xf32>
    %131 = arith.addf %128, %130 : vector<2x4xf32>
    %cst_92 = arith.constant 0.000000e+00 : f32
    %132 = vector.broadcast %cst_92 : f32 to vector<2x4xf32>
    %133 = arith.maximumf %131, %132 : vector<2x4xf32>
    %134 = arith.truncf %133 : vector<2x4xf32> to vector<2x4xbf16>
    %c736 = arith.constant 736 : index
    %c0_93 = arith.constant 0 : index
    %135 = vector.load %arg1[%c736, %c0_93] : memref<1136x256xbf16, #tpu.memory_space<vmem>>, vector<4x64xbf16>
    %cst_94 = arith.constant dense<0.000000e+00> : vector<2x64xf32>
    %136 = tpu.matmul %134, %135, %cst_94 {dimension_numbers = #tpu.dot_dimension_numbers<[1], [0], [0], [1], [0, 0, 1, 1], [], []>} : vector<2x4xbf16>, vector<4x64xbf16>, vector<2x64xf32> -> vector<2x64xf32>
    %c4_95 = arith.constant 4 : index
    %c0_96 = arith.constant 0 : index
    %137 = vector.load %arg2[%c4_95, %c0_96] : memref<10x256xf32, #tpu.memory_space<vmem>>, vector<1x64xf32>
    %138 = vector.broadcast %137 : vector<1x64xf32> to vector<2x64xf32>
    %139 = arith.addf %136, %138 : vector<2x64xf32>
    %cst_97 = arith.constant 0.000000e+00 : f32
    %140 = vector.broadcast %cst_97 : f32 to vector<2x64xf32>
    %141 = arith.subf %140, %139 : vector<2x64xf32>
    %142 = math.exp %141 : vector<2x64xf32>
    %cst_98 = arith.constant 1.000000e+00 : f32
    %143 = vector.broadcast %cst_98 : f32 to vector<2x64xf32>
    %144 = arith.addf %143, %142 : vector<2x64xf32>
    %cst_99 = arith.constant 1.000000e+00 : f32
    %145 = vector.broadcast %cst_99 : f32 to vector<2x64xf32>
    %146 = arith.divf %145, %144 : vector<2x64xf32>
    %c1104 = arith.constant 1104 : index
    %c0_100 = arith.constant 0 : index
    %147 = vector.load %arg1[%c1104, %c0_100] : memref<1136x256xbf16, #tpu.memory_space<vmem>>, vector<32x2xbf16>
    %148 = arith.truncf %146 : vector<2x64xf32> to vector<2x64xbf16>
    %cst_101 = arith.constant dense<0.000000e+00> : vector<32x64xf32>
    %149 = tpu.matmul %147, %148, %cst_101 {dimension_numbers = #tpu.dot_dimension_numbers<[1], [0], [0], [1], [0, 0, 1, 1], [], []>} : vector<32x2xbf16>, vector<2x64xbf16>, vector<32x64xf32> -> vector<32x64xf32>
    %150 = arith.mulf %119, %149 : vector<32x64xf32>
    %151 = arith.addf %150, %120 : vector<32x64xf32>
    %cst_102 = arith.constant 0.000000e+00 : f32
    %152 = vector.shape_cast %32 : vector<32x1xi1> to vector<32x1xi1>
    %153 = vector.broadcast %152 : vector<32x1xi1> to vector<32x64xi1>
    %154 = vector.broadcast %cst_102 : f32 to vector<32x64xf32>
    %155 = arith.select %153, %151, %154 : vector<32x64xi1>, vector<32x64xf32>
    %c2_103 = arith.constant 2 : index
    %c0_104 = arith.constant 0 : index
    %156 = vector.load %arg9[%c2_103, %c0_104] : memref<40x64xf32, #tpu.memory_space<vmem>>, vector<32x64xf32>
    tpu.vector_store %arg9[%c2_103, %c0_104], %155 {strides = array<i32>} : memref<40x64xf32, #tpu.memory_space<vmem>>, vector<32x64xf32>,
    %c2_105 = arith.constant 2 : index
    %c0_106 = arith.constant 0 : index
    %157 = vector.load %arg9[%c2_105, %c0_106] : memref<40x64xf32, #tpu.memory_space<vmem>>, vector<32x64xf32>
    %c0_107 = arith.constant 0 : index
    %c0_108 = arith.constant 0 : index
    %158 = vector.load %arg9[%c0_107, %c0_108] : memref<40x64xf32, #tpu.memory_space<vmem>>, vector<32x64xf32>
    %c1_109 = arith.constant 1 : index
    %c0_110 = arith.constant 0 : index
    %159 = vector.load %arg9[%c1_109, %c0_110] : memref<40x64xf32, #tpu.memory_space<vmem>>, vector<32x64xf32>
    %c3_111 = arith.constant 3 : index
    %c0_112 = arith.constant 0 : index
    %160 = vector.load %arg9[%c3_111, %c0_112] : memref<40x64xf32, #tpu.memory_space<vmem>>, vector<32x64xf32>
    %c4_113 = arith.constant 4 : index
    %c0_114 = arith.constant 0 : index
    %161 = vector.load %arg9[%c4_113, %c0_114] : memref<40x64xf32, #tpu.memory_space<vmem>>, vector<32x64xf32>
    %162 = vector.extract_strided_slice %20 {offsets = [1, 0], sizes = [32, 1], strides = [1, 1]} : vector<40x1xf32> to vector<32x1xf32>
    %163 = vector.broadcast %162 : vector<32x1xf32> to vector<32x64xf32>
    %164 = arith.addf %159, %163 : vector<32x64xf32>
    %165 = vector.extract_strided_slice %20 {offsets = [2, 0], sizes = [32, 1], strides = [1, 1]} : vector<40x1xf32> to vector<32x1xf32>
    %166 = vector.broadcast %165 : vector<32x1xf32> to vector<32x64xf32>
    %167 = arith.addf %157, %166 : vector<32x64xf32>
    %168 = arith.maximumf %164, %167 : vector<32x64xf32>
    %169 = vector.extract_strided_slice %20 {offsets = [3, 0], sizes = [32, 1], strides = [1, 1]} : vector<40x1xf32> to vector<32x1xf32>
    %170 = vector.broadcast %169 : vector<32x1xf32> to vector<32x64xf32>
    %171 = arith.addf %160, %170 : vector<32x64xf32>
    %172 = arith.maximumf %168, %171 : vector<32x64xf32>
    %173 = arith.truncf %157 : vector<32x64xf32> to vector<32x64xbf16>
    %c0_115 = arith.constant 0 : index
    %c0_116 = arith.constant 0 : index
    %174 = vector.load %arg10[%c0_115, %c0_116] : memref<32x384xbf16, #tpu.memory_space<vmem>>, vector<32x64xbf16>
    tpu.vector_store %arg10[%c0_115, %c0_116], %173 {strides = array<i32>} : memref<32x384xbf16, #tpu.memory_space<vmem>>, vector<32x64xbf16>,
    %175 = arith.truncf %158 : vector<32x64xf32> to vector<32x64xbf16>
    %c0_117 = arith.constant 0 : index
    %c64_118 = arith.constant 64 : index
    %176 = vector.load %arg10[%c0_117, %c64_118] : memref<32x384xbf16, #tpu.memory_space<vmem>>, vector<32x64xbf16>
    tpu.vector_store %arg10[%c0_117, %c64_118], %175 {strides = array<i32>} : memref<32x384xbf16, #tpu.memory_space<vmem>>, vector<32x64xbf16>,
    %177 = arith.truncf %159 : vector<32x64xf32> to vector<32x64xbf16>
    %c0_119 = arith.constant 0 : index
    %c128_120 = arith.constant 128 : index
    %178 = vector.load %arg10[%c0_119, %c128_120] : memref<32x384xbf16, #tpu.memory_space<vmem>>, vector<32x64xbf16>
    tpu.vector_store %arg10[%c0_119, %c128_120], %177 {strides = array<i32>} : memref<32x384xbf16, #tpu.memory_space<vmem>>, vector<32x64xbf16>,
    %179 = arith.truncf %160 : vector<32x64xf32> to vector<32x64xbf16>
    %c0_121 = arith.constant 0 : index
    %c192 = arith.constant 192 : index
    %180 = vector.load %arg10[%c0_121, %c192] : memref<32x384xbf16, #tpu.memory_space<vmem>>, vector<32x64xbf16>
    tpu.vector_store %arg10[%c0_121, %c192], %179 {strides = array<i32>} : memref<32x384xbf16, #tpu.memory_space<vmem>>, vector<32x64xbf16>,
    %181 = arith.truncf %161 : vector<32x64xf32> to vector<32x64xbf16>
    %c0_122 = arith.constant 0 : index
    %c256 = arith.constant 256 : index
    %182 = vector.load %arg10[%c0_122, %c256] : memref<32x384xbf16, #tpu.memory_space<vmem>>, vector<32x64xbf16>
    tpu.vector_store %arg10[%c0_122, %c256], %181 {strides = array<i32>} : memref<32x384xbf16, #tpu.memory_space<vmem>>, vector<32x64xbf16>,
    %183 = arith.truncf %172 : vector<32x64xf32> to vector<32x64xbf16>
    %c0_123 = arith.constant 0 : index
    %c320 = arith.constant 320 : index
    %184 = vector.load %arg10[%c0_123, %c320] : memref<32x384xbf16, #tpu.memory_space<vmem>>, vector<32x64xbf16>
    tpu.vector_store %arg10[%c0_123, %c320], %183 {strides = array<i32>} : memref<32x384xbf16, #tpu.memory_space<vmem>>, vector<32x64xbf16>,
    %c0_124 = arith.constant 0 : index
    %c0_125 = arith.constant 0 : index
    %185 = vector.load %arg10[%c0_124, %c0_125] : memref<32x384xbf16, #tpu.memory_space<vmem>>, vector<32x384xbf16>
    %c288 = arith.constant 288 : index
    %c0_126 = arith.constant 0 : index
    %186 = vector.load %arg1[%c288, %c0_126] : memref<1136x256xbf16, #tpu.memory_space<vmem>>, vector<384x256xbf16>
    %cst_127 = arith.constant dense<0.000000e+00> : vector<32x256xf32>
    %187 = tpu.matmul %185, %186, %cst_127 {dimension_numbers = #tpu.dot_dimension_numbers<[1], [0], [0], [1], [0, 0, 1, 1], [], []>} : vector<32x384xbf16>, vector<384x256xbf16>, vector<32x256xf32> -> vector<32x256xf32>
    %c5 = arith.constant 5 : index
    %c0_128 = arith.constant 0 : index
    %188 = vector.load %arg2[%c5, %c0_128] : memref<10x256xf32, #tpu.memory_space<vmem>>, vector<1x256xf32>
    %189 = vector.broadcast %188 : vector<1x256xf32> to vector<32x256xf32>
    %190 = arith.addf %187, %189 : vector<32x256xf32>
    %191 = vector.extract_strided_slice %190 {offsets = [0, 0], sizes = [32, 128], strides = [1, 1]} : vector<32x256xf32> to vector<32x128xf32>
    %cst_129 = arith.constant 0.000000e+00 : f32
    %192 = vector.broadcast %cst_129 : f32 to vector<32x128xf32>
    %193 = arith.maximumf %191, %192 : vector<32x128xf32>
    %194 = vector.extract_strided_slice %190 {offsets = [0, 128], sizes = [32, 128], strides = [1, 1]} : vector<32x256xf32> to vector<32x128xf32>
    %c1088_130 = arith.constant 1088 : index
    %c0_131 = arith.constant 0 : index
    %195 = vector.load %arg1[%c1088_130, %c0_131] : memref<1136x256xbf16, #tpu.memory_space<vmem>>, vector<2x32xbf16>
    %196 = arith.truncf %193 : vector<32x128xf32> to vector<32x128xbf16>
    %cst_132 = arith.constant dense<0.000000e+00> : vector<2x128xf32>
    %197 = tpu.matmul %195, %196, %cst_132 {dimension_numbers = #tpu.dot_dimension_numbers<[1], [0], [0], [1], [0, 0, 1, 1], [], []>} : vector<2x32xbf16>, vector<32x128xbf16>, vector<2x128xf32> -> vector<2x128xf32>
    %cst_133 = arith.constant 0.0769230798 : f32
    %198 = vector.broadcast %cst_133 : f32 to vector<2x128xf32>
    %199 = arith.mulf %197, %198 : vector<2x128xf32>
    %200 = arith.truncf %199 : vector<2x128xf32> to vector<2x128xbf16>
    %c752 = arith.constant 752 : index
    %c0_134 = arith.constant 0 : index
    %201 = vector.load %arg1[%c752, %c0_134] : memref<1136x256xbf16, #tpu.memory_space<vmem>>, vector<128x8xbf16>
    %cst_135 = arith.constant dense<0.000000e+00> : vector<2x8xf32>
    %202 = tpu.matmul %200, %201, %cst_135 {dimension_numbers = #tpu.dot_dimension_numbers<[1], [0], [0], [1], [0, 0, 1, 1], [], []>} : vector<2x128xbf16>, vector<128x8xbf16>, vector<2x8xf32> -> vector<2x8xf32>
    %c6 = arith.constant 6 : index
    %c0_136 = arith.constant 0 : index
    %203 = vector.load %arg2[%c6, %c0_136] : memref<10x256xf32, #tpu.memory_space<vmem>>, vector<1x8xf32>
    %204 = vector.broadcast %203 : vector<1x8xf32> to vector<2x8xf32>
    %205 = arith.addf %202, %204 : vector<2x8xf32>
    %cst_137 = arith.constant 0.000000e+00 : f32
    %206 = vector.broadcast %cst_137 : f32 to vector<2x8xf32>
    %207 = arith.maximumf %205, %206 : vector<2x8xf32>
    %208 = arith.truncf %207 : vector<2x8xf32> to vector<2x8xbf16>
    %c880 = arith.constant 880 : index
    %c0_138 = arith.constant 0 : index
    %209 = vector.load %arg1[%c880, %c0_138] : memref<1136x256xbf16, #tpu.memory_space<vmem>>, vector<8x128xbf16>
    %cst_139 = arith.constant dense<0.000000e+00> : vector<2x128xf32>
    %210 = tpu.matmul %208, %209, %cst_139 {dimension_numbers = #tpu.dot_dimension_numbers<[1], [0], [0], [1], [0, 0, 1, 1], [], []>} : vector<2x8xbf16>, vector<8x128xbf16>, vector<2x128xf32> -> vector<2x128xf32>
    %c7 = arith.constant 7 : index
    %c0_140 = arith.constant 0 : index
    %211 = vector.load %arg2[%c7, %c0_140] : memref<10x256xf32, #tpu.memory_space<vmem>>, vector<1x128xf32>
    %212 = vector.broadcast %211 : vector<1x128xf32> to vector<2x128xf32>
    %213 = arith.addf %210, %212 : vector<2x128xf32>
    %cst_141 = arith.constant 0.000000e+00 : f32
    %214 = vector.broadcast %cst_141 : f32 to vector<2x128xf32>
    %215 = arith.subf %214, %213 : vector<2x128xf32>
    %216 = math.exp %215 : vector<2x128xf32>
    %cst_142 = arith.constant 1.000000e+00 : f32
    %217 = vector.broadcast %cst_142 : f32 to vector<2x128xf32>
    %218 = arith.addf %217, %216 : vector<2x128xf32>
    %cst_143 = arith.constant 1.000000e+00 : f32
    %219 = vector.broadcast %cst_143 : f32 to vector<2x128xf32>
    %220 = arith.divf %219, %218 : vector<2x128xf32>
    %c1104_144 = arith.constant 1104 : index
    %c0_145 = arith.constant 0 : index
    %221 = vector.load %arg1[%c1104_144, %c0_145] : memref<1136x256xbf16, #tpu.memory_space<vmem>>, vector<32x2xbf16>
    %222 = arith.truncf %220 : vector<2x128xf32> to vector<2x128xbf16>
    %cst_146 = arith.constant dense<0.000000e+00> : vector<32x128xf32>
    %223 = tpu.matmul %221, %222, %cst_146 {dimension_numbers = #tpu.dot_dimension_numbers<[1], [0], [0], [1], [0, 0, 1, 1], [], []>} : vector<32x2xbf16>, vector<2x128xbf16>, vector<32x128xf32> -> vector<32x128xf32>
    %224 = arith.mulf %193, %223 : vector<32x128xf32>
    %225 = arith.addf %224, %194 : vector<32x128xf32>
    %cst_147 = arith.constant 0.000000e+00 : f32
    %226 = vector.shape_cast %32 : vector<32x1xi1> to vector<32x1xi1>
    %227 = vector.broadcast %226 : vector<32x1xi1> to vector<32x128xi1>
    %228 = vector.broadcast %cst_147 : f32 to vector<32x128xf32>
    %229 = arith.select %227, %225, %228 : vector<32x128xi1>, vector<32x128xf32>
    %c1088_148 = arith.constant 1088 : index
    %c0_149 = arith.constant 0 : index
    %230 = vector.load %arg1[%c1088_148, %c0_149] : memref<1136x256xbf16, #tpu.memory_space<vmem>>, vector<2x32xbf16>
    %231 = arith.truncf %229 : vector<32x128xf32> to vector<32x128xbf16>
    %cst_150 = arith.constant dense<0.000000e+00> : vector<2x128xf32>
    %232 = tpu.matmul %230, %231, %cst_150 {dimension_numbers = #tpu.dot_dimension_numbers<[1], [0], [0], [1], [0, 0, 1, 1], [], []>} : vector<2x32xbf16>, vector<32x128xbf16>, vector<2x128xf32> -> vector<2x128xf32>
    %cst_151 = arith.constant 0.0769230798 : f32
    %233 = vector.broadcast %cst_151 : f32 to vector<2x128xf32>
    %234 = arith.mulf %232, %233 : vector<2x128xf32>
    %235 = arith.truncf %234 : vector<2x128xf32> to vector<2x128xbf16>
    %c896 = arith.constant 896 : index
    %c0_152 = arith.constant 0 : index
    %236 = vector.load %arg1[%c896, %c0_152] : memref<1136x256xbf16, #tpu.memory_space<vmem>>, vector<128x64xbf16>
    %cst_153 = arith.constant dense<0.000000e+00> : vector<2x64xf32>
    %237 = tpu.matmul %235, %236, %cst_153 {dimension_numbers = #tpu.dot_dimension_numbers<[1], [0], [0], [1], [0, 0, 1, 1], [], []>} : vector<2x128xbf16>, vector<128x64xbf16>, vector<2x64xf32> -> vector<2x64xf32>
    %c8 = arith.constant 8 : index
    %c0_154 = arith.constant 0 : index
    %238 = vector.load %arg2[%c8, %c0_154] : memref<10x256xf32, #tpu.memory_space<vmem>>, vector<1x64xf32>
    %239 = vector.broadcast %238 : vector<1x64xf32> to vector<2x64xf32>
    %240 = arith.addf %237, %239 : vector<2x64xf32>
    %cst_155 = arith.constant 0.000000e+00 : f32
    %241 = vector.broadcast %cst_155 : f32 to vector<2x64xf32>
    %242 = arith.maximumf %240, %241 : vector<2x64xf32>
    %243 = arith.truncf %242 : vector<2x64xf32> to vector<2x64xbf16>
    %c1024 = arith.constant 1024 : index
    %c0_156 = arith.constant 0 : index
    %244 = vector.load %arg1[%c1024, %c0_156] : memref<1136x256xbf16, #tpu.memory_space<vmem>>, vector<64x2xbf16>
    %cst_157 = arith.constant dense<0.000000e+00> : vector<2x2xf32>
    %245 = tpu.matmul %243, %244, %cst_157 {dimension_numbers = #tpu.dot_dimension_numbers<[1], [0], [0], [1], [0, 0, 1, 1], [], []>} : vector<2x64xbf16>, vector<64x2xbf16>, vector<2x2xf32> -> vector<2x2xf32>
    %c9 = arith.constant 9 : index
    %c0_158 = arith.constant 0 : index
    %246 = vector.load %arg2[%c9, %c0_158] : memref<10x256xf32, #tpu.memory_space<vmem>>, vector<1x2xf32>
    %247 = vector.broadcast %246 : vector<1x2xf32> to vector<2x2xf32>
    %248 = arith.addf %245, %247 : vector<2x2xf32>
    %cst_159 = arith.constant dense<0xFF800000> : vector<2xf32>
    %249 = vector.multi_reduction <maximumf>, %248, %cst_159 [1] : vector<2x2xf32> to vector<2xf32>
    %250 = vector.shape_cast %249 : vector<2xf32> to vector<2x1xf32>
    %251 = vector.broadcast %250 : vector<2x1xf32> to vector<2x2xf32>
    %252 = arith.subf %248, %251 : vector<2x2xf32>
    %253 = math.exp %252 : vector<2x2xf32>
    %cst_160 = arith.constant dense<0.000000e+00> : vector<2xf32>
    %254 = vector.multi_reduction <add>, %253, %cst_160 [1] : vector<2x2xf32> to vector<2xf32>
    %255 = vector.shape_cast %254 : vector<2xf32> to vector<2x1xf32>
    %256 = math.log %255 : vector<2x1xf32>
    %257 = vector.broadcast %250 : vector<2x1xf32> to vector<2x2xf32>
    %258 = arith.subf %248, %257 : vector<2x2xf32>
    %259 = vector.broadcast %256 : vector<2x1xf32> to vector<2x2xf32>
    %260 = arith.subf %258, %259 : vector<2x2xf32>
    %c0_161 = arith.constant 0 : index
    %c0_162 = arith.constant 0 : index
    %261 = vector.load %arg3[%c0_161, %c0_162] : memref<2x2xf32, #tpu.memory_space<vmem>>, vector<2x2xf32>
    tpu.vector_store %arg3[%c0_161, %c0_162], %260 {strides = array<i32>} : memref<2x2xf32, #tpu.memory_space<vmem>>, vector<2x2xf32>,
    return
  }
}

</mosaic_0001>

<llo_original>
// kernel: forward.1
$region0: #{forward.1}
  #allocation0 [shape = 'u32[]', space=smem, size = 0x4, offset = 0x4, fixed_abs, tag = 'smem constant byte address 0x4 - core index']
  #allocation1 [shape = 'u32[72,128]{1,0:T(1,128)}', space=vmem, size = 0x9000, scoped, tag = 'internal scratch']
  #allocation2 [shape = 'f32[72,16]{1,0:T(8,128)}', space=vmem, size = 0x9000, scoped, tag = 'scratch operand']
  #allocation3 [shape = 'bf16[64,80]{1,0:T(8,128)(2,1)}', space=vmem, size = 0x4000, scoped, tag = 'scratch operand']
  #allocation4 [shape = 'f32[64,32]{1,0:T(8,128)}', space=vmem, size = 0x8000, scoped, tag = 'scratch operand']
  #allocation5 [shape = 'f32[40,32]{1,0:T(8,128)}', space=vmem, size = 0x5000, scoped, tag = 'scratch operand']
  #allocation6 [shape = 'bf16[32,192]{1,0:T(8,128)(2,1)}', space=vmem, size = 0x4000, scoped, tag = 'scratch operand']
  #allocation7 [shape = 'f32[40,64]{1,0:T(8,128)}', space=vmem, size = 0x5000, scoped, tag = 'scratch operand']
  #allocation8 [shape = 'bf16[32,384]{1,0:T(8,128)(2,1)}', space=vmem, size = 0x6000, scoped, tag = 'scratch operand']
  %s0 = inlined_call_operand.vmem [shape: bf16[128,5], index: 0, kind: input, shape index: {}]
  %s1 = inlined_call_operand.vmem [shape: bf16[1136,256], index: 1, kind: input, shape index: {}]
  %s2 = inlined_call_operand.vmem [shape: f32[10,256], index: 2, kind: input, shape index: {}]
  %s3 = inlined_call_operand.hbm [shape: f32[2,2], index: 3, kind: output, shape index: {}]
  %s4 = sld [smem:[#allocation0]]
  $region22: #{forward.1} parent=0
    _
  %s6 = ssub.s32 1, %s4
  %s7 = scalar_select 0, %s6, %s4
  $region1: #{forward.1} parent=0
    #allocation9 [shape = 'u8[1024]{0}', space=vmem, size = 0x400, scoped, tag = 'output window, operand 0, single buffered']
    #allocation10 [shape = 's32[1]{0}', space=sflag, size = 0x4, scoped, tag = 'scoped memory for forward.1']
    %8 = vsyncpa [#allocation10], 0
    // Predicated region
    $region2: #{forward.1} parent=1 // pred_check
      _
    $region3: #{forward.1} parent=1 // pred_check_branch
      %10 = sbr.rel (0) target = $region5
    $region4: #{forward.1} parent=1 // pred_region
      _
    $region5: #{forward.1} parent=1 // pred_fallthru
      _
    // Predicated region
    $region6: #{forward.1} parent=1 // pred_check
      _
    $region7: #{forward.1} parent=1 // pred_check_branch
      %12 = sbr.rel (0) target = $region9
    $region8: #{forward.1} parent=1 // pred_region
      _
    $region9: #{forward.1} parent=1 // pred_fallthru
      _
    // Predicated region
    $region10: #{forward.1} parent=1 // pred_check
      _
    $region11: #{forward.1} parent=1 // pred_check_branch
      %14 = sbr.rel (0) target = $region13
    $region12: #{forward.1} parent=1 // pred_region
      _
    $region13: #{forward.1} parent=1 // pred_fallthru
      _
    %v16 = vlaneseq
    %v17 = vshrl.u32 %v16, 7
    %v18 = vadd.s32 %v17, 8
    %v19 = vadd.s32 %v17, 16
    %v20 = vadd.s32 %v17, 24
    %v21 = vadd.s32 %v17, 32
    %v22 = vcvt.s32.f32 %v17
    %v23 = vcvt.s32.f32 %v18
    %v24 = vcvt.s32.f32 %v19
    %v25 = vcvt.s32.f32 %v20
    %v26 = vcvt.s32.f32 %v21
    %v27 = vmul.f32 %v22, 0.0625
    %v28 = vmul.f32 %v23, 0.0625
    %v29 = vmul.f32 %v24, 0.0625
    %v30 = vmul.f32 %v25, 0.0625
    %v31 = vmul.f32 %v26, 0.0625
    %v32 = vadd.f32 %v27, 1e-06
    %v33 = vadd.f32 %v28, 1e-06
    %v34 = vadd.f32 %v29, 1e-06
    %v35 = vadd.f32 %v30, 1e-06
    %v36 = vadd.f32 %v31, 1e-06
    %v37 = vfloor.f32 %v32
    %v38 = vfloor.f32 %v33
    %v39 = vfloor.f32 %v34
    %v40 = vfloor.f32 %v35
    %v41 = vfloor.f32 %v36
    %v42 = vmul.f32 %v37, 16.0
    %v43 = vmul.f32 %v38, 16.0
    %v44 = vmul.f32 %v39, 16.0
    %v45 = vmul.f32 %v40, 16.0
    %v46 = vmul.f32 %v41, 16.0
    %v47 = vsub.f32 %v22, %v42
    %v48 = vsub.f32 %v23, %v43
    %v49 = vsub.f32 %v24, %v44
    %v50 = vsub.f32 %v25, %v45
    %v51 = vsub.f32 %v26, %v46
    %vm52 = vcmp.gt.f32.partialorder %v47, 1.5
    %vm53 = vcmp.gt.f32.partialorder %v48, 1.5
    %vm54 = vcmp.gt.f32.partialorder %v49, 1.5
    %vm55 = vcmp.gt.f32.partialorder %v50, 1.5
    %vm56 = vcmp.gt.f32.partialorder %v51, 1.5
    %vm57 = vcmp.lt.f32.partialorder %v47, 14.5
    %vm58 = vcmp.lt.f32.partialorder %v48, 14.5
    %vm59 = vcmp.lt.f32.partialorder %v49, 14.5
    %vm60 = vcmp.lt.f32.partialorder %v50, 14.5
    %vm61 = vcmp.lt.f32.partialorder %v51, 14.5
    %vm62 = vmand %vm52, %vm57
    %vm63 = vmand %vm53, %vm58
    %vm64 = vmand %vm54, %vm59
    %vm65 = vmand %vm55, %vm60
    %vm66 = vmand %vm56, %vm61
    %vm67 = vcmp.lt.f32.partialorder %v22, 31.5
    %vm68 = vcmp.lt.f32.partialorder %v23, 31.5
    %vm69 = vcmp.lt.f32.partialorder %v24, 31.5
    %vm70 = vcmp.lt.f32.partialorder %v25, 31.5
    %vm71 = vcmp.lt.f32.partialorder %v26, 31.5
    %vm72 = vmand %vm62, %vm67
    %vm73 = vmand %vm63, %vm68
    %vm74 = vmand %vm64, %vm69
    %vm75 = vmand %vm65, %vm70
    %vm76 = vmand %vm66, %vm71
    %v77 = vsel %vm72, 0.0, -1e+09
    %v78 = vsel %vm73, 0.0, -1e+09
    %v79 = vsel %vm74, 0.0, -1e+09
    %v80 = vsel %vm75, 0.0, -1e+09
    %v81 = vsel %vm76, 0.0, -1e+09
    %vm82 = vcmp.lt.f32.partialorder %v47, 12.5
    %vm83 = vcmp.lt.f32.partialorder %v48, 12.5
    %vm84 = vcmp.lt.f32.partialorder %v49, 12.5
    %vm85 = vcmp.lt.f32.partialorder %v50, 12.5
    %vm86 = vcmask 130048
    %87 = vst.msk [vmem:[#allocation2] sm:$0xff] %vm86, 0.0
    %88 = vst.msk [vmem:[#allocation2 + $0x8] sm:$0xff] %vm86, 0.0
    %89 = vst.msk [vmem:[#allocation2 + $0x10] sm:$0xff] %vm86, 0.0
    %90 = vst.msk [vmem:[#allocation2 + $0x18] sm:$0xff] %vm86, 0.0
    %91 = vst.msk [vmem:[#allocation2 + $0x20] sm:$0xff] %vm86, 0.0
    %92 = vst.msk [vmem:[#allocation2 + $0x28] sm:$0xff] %vm86, 0.0
    %93 = vst.msk [vmem:[#allocation2 + $0x30] sm:$0xff] %vm86, 0.0
    %94 = vst.msk [vmem:[#allocation2 + $0x38] sm:$0xff] %vm86, 0.0
    %95 = vst.msk [vmem:[#allocation2 + $0x40] sm:$0xff] %vm86, 0.0
    %vm96 = vcmask 261120
    %97 = vst.msk [vmem:[#allocation5] sm:$0xff] %vm96, 0.0
    %98 = vst.msk [vmem:[#allocation5 + $0x8] sm:$0xff] %vm96, 0.0
    %99 = vst.msk [vmem:[#allocation5 + $0x10] sm:$0xff] %vm96, 0.0
    %100 = vst.msk [vmem:[#allocation5 + $0x18] sm:$0xff] %vm96, 0.0
    %101 = vst.msk [vmem:[#allocation5 + $0x20] sm:$0xff] %vm96, 0.0
    %vm102 = vcmask 523264
    %103 = vst.msk [vmem:[#allocation7] sm:$0xff] %vm102, 0.0
    %104 = vst.msk [vmem:[#allocation7 + $0x8] sm:$0xff] %vm102, 0.0
    %105 = vst.msk [vmem:[#allocation7 + $0x10] sm:$0xff] %vm102, 0.0
    %106 = vst.msk [vmem:[#allocation7 + $0x18] sm:$0xff] %vm102, 0.0
    %107 = vst.msk [vmem:[#allocation7 + $0x20] sm:$0xff] %vm102, 0.0
    %v108 = vld [vmem:[%s0] sm:$0xf]
    %v109 = vld [vmem:[%s0 + $0x4] sm:$0xf]
    %v110 = vld [vmem:[%s0 + $0x8] sm:$0xf]
    %v111 = vld [vmem:[%s0 + $0xc] sm:$0xf]
    %v112 = vld [vmem:[%s0 + $0x10] sm:$0xf]
    %v113 = vld [vmem:[%s0 + $0x14] sm:$0xf]
    %v114 = vld [vmem:[%s0 + $0x18] sm:$0xf]
    %v115 = vld [vmem:[%s0 + $0x1c] sm:$0xf]
    %v116 = vld [vmem:[%s0 + $0x20] sm:$0xf]
    %v117 = vld [vmem:[%s0 + $0x24] sm:$0xf]
    %v118 = vld [vmem:[%s0 + $0x28] sm:$0xf]
    %v119 = vld [vmem:[%s0 + $0x2c] sm:$0xf]
    %v120 = vld [vmem:[%s0 + $0x30] sm:$0xf]
    %v121 = vld [vmem:[%s0 + $0x34] sm:$0xf]
    %v122 = vld [vmem:[%s0 + $0x38] sm:$0xf]
    %v123 = vld [vmem:[%s0 + $0x3c] sm:$0xf]
    %v124 = vld [vmem:[%s1] sm:$0x7]
    %v125 = vld [vmem:[%s2] ss:$0 sm:$0xff]
    %v142 = vunpack.c.l.b16 %v108
    %v143 = vunpack.c.l.b16 %v109
    %v144 = vunpack.c.l.b16 %v110
    %v145 = vunpack.c.l.b16 %v111
    %v146 = vunpack.c.l.b16 %v112
    %v147 = vunpack.c.l.b16 %v113
    %v148 = vunpack.c.l.b16 %v114
    %v149 = vunpack.c.l.b16 %v115
    %v150 = vunpack.c.l.b16 %v116
    %v151 = vunpack.c.l.b16 %v117
    %v152 = vunpack.c.l.b16 %v118
    %v153 = vunpack.c.l.b16 %v119
    %v154 = vunpack.c.l.b16 %v120
    %v155 = vunpack.c.l.b16 %v121
    %v156 = vunpack.c.l.b16 %v122
    %v157 = vunpack.c.l.b16 %v123
    %v158 = vpack.c.b16 %v143, %v142
    %v159 = vpack.c.b16 %v145, %v144
    %v160 = vpack.c.b16 %v147, %v146
    %v161 = vpack.c.b16 %v149, %v148
    %v162 = vpack.c.b16 %v151, %v150
    %v163 = vpack.c.b16 %v153, %v152
    %v164 = vpack.c.b16 %v155, %v154
    %v165 = vpack.c.b16 %v157, %v156
    %vm166 = vcmask 39936
    %v168 = vsel %vm166, %v158, 0
    %v171 = vsel %vm166, %v159, 0
    %v174 = vsel %vm166, %v160, 0
    %v177 = vsel %vm166, %v161, 0
    %v180 = vsel %vm166, %v162, 0
    %v183 = vsel %vm166, %v163, 0
    %v186 = vsel %vm166, %v164, 0
    %v189 = vsel %vm166, %v165, 0
    %vm191 = vcmask 1041408
    %vm192 = vcmask 1042432
    %v193 = vsel %vm191, 4294967295, 65535
    %v194 = vsel %vm192, %v193, 0
    %v196 = vand.u32 %v124, %v194
    %198 = vmatpush.bf16.msra.mxu0 0
    %199 = vmatpush.bf16.msra.mxu0 0
    %200 = vmatpush.bf16.msra.mxu0 0
    %201 = vmatpush.bf16.msra.mxu0 0
    %202 = vmatpush.bf16.msra.mxu0 0
    %203 = vmatpush.bf16.msra.mxu0 0
    %204 = vmatpush.bf16.msra.mxu0 0
    %205 = vmatpush.bf16.msra.mxu0 %v196
    %206 = vmatmul.bf16.gmra.mxu0 %v168
    %v207 = vpop.f32.mrf.mxu0
    %v208 = vadd.f32 %v125, %v207
    %v209 = vpop.f32.mrf.mxu0
    %v210 = vadd.f32 %v125, %v209
    %211 = vmatmul.bf16.gmra.mxu0 %v171
    %v212 = vpop.f32.mrf.mxu0
    %v213 = vadd.f32 %v125, %v212
    %v214 = vpop.f32.mrf.mxu0
    %v215 = vadd.f32 %v125, %v214
    %216 = vmatmul.bf16.gmra.mxu0 %v174
    %v217 = vpop.f32.mrf.mxu0
    %v218 = vadd.f32 %v125, %v217
    %v219 = vpop.f32.mrf.mxu0
    %v220 = vadd.f32 %v125, %v219
    %221 = vmatmul.bf16.gmra.mxu0 %v177
    %v222 = vpop.f32.mrf.mxu0
    %v223 = vadd.f32 %v125, %v222
    %v224 = vpop.f32.mrf.mxu0
    %v225 = vadd.f32 %v125, %v224
    %226 = vmatmul.bf16.gmra.mxu0 %v180
    %v227 = vpop.f32.mrf.mxu0
    %v228 = vadd.f32 %v125, %v227
    %v229 = vpop.f32.mrf.mxu0
    %v230 = vadd.f32 %v125, %v229
    %231 = vmatmul.bf16.gmra.mxu0 %v183
    %v232 = vpop.f32.mrf.mxu0
    %v233 = vadd.f32 %v125, %v232
    %v234 = vpop.f32.mrf.mxu0
    %v235 = vadd.f32 %v125, %v234
    %236 = vmatmul.bf16.gmra.mxu0 %v186
    %v237 = vpop.f32.mrf.mxu0
    %v238 = vadd.f32 %v125, %v237
    %v239 = vpop.f32.mrf.mxu0
    %v240 = vadd.f32 %v125, %v239
    %241 = vmatmul.bf16.gmra.mxu0 %v189
    %v242 = vpop.f32.mrf.mxu0
    %v243 = vadd.f32 %v125, %v242
    %v244 = vpop.f32.mrf.mxu0
    %v245 = vadd.f32 %v125, %v244
    %246 = vdwg.mxu0
    %v247 = vmax.f32 %v208, 0.0
    %v248 = vmax.f32 %v210, 0.0
    %v249 = vmax.f32 %v213, 0.0
    %v250 = vmax.f32 %v215, 0.0
    %v251 = vmax.f32 %v218, 0.0
    %v252 = vmax.f32 %v220, 0.0
    %v253 = vmax.f32 %v223, 0.0
    %v254 = vmax.f32 %v225, 0.0
    %v255 = vmax.f32 %v228, 0.0
    %v256 = vmax.f32 %v230, 0.0
    %v257 = vmax.f32 %v233, 0.0
    %v258 = vmax.f32 %v235, 0.0
    %v259 = vmax.f32 %v238, 0.0
    %v260 = vmax.f32 %v240, 0.0
    %v261 = vmax.f32 %v243, 0.0
    %v262 = vmax.f32 %v245, 0.0
    %v263 = vmax.f32 %v247, %v255
    %v264 = vmax.f32 %v248, %v256
    %v265 = vmax.f32 %v249, %v257
    %v266 = vmax.f32 %v250, %v258
    %v267 = vmax.f32 %v251, %v259
    %v268 = vmax.f32 %v252, %v260
    %v269 = vmax.f32 %v253, %v261
    %v270 = vmax.f32 %v254, %v262
    %271 = vst.msk [vmem:[#allocation2] sm:$0xff] %vm86, %v263
    %272 = vst.msk [vmem:[#allocation2 + $0x8] sm:$0xff] %vm86, %v264
    %273 = vst.msk [vmem:[#allocation2 + $0x10] sm:$0xff] %vm86, %v265
    %274 = vst.msk [vmem:[#allocation2 + $0x18] sm:$0xff] %vm86, %v266
    %275 = vst.msk [vmem:[#allocation2 + $0x20] sm:$0xff] %vm86, %v267
    %276 = vst.msk [vmem:[#allocation2 + $0x28] sm:$0xff] %vm86, %v268
    %277 = vst.msk [vmem:[#allocation2 + $0x30] sm:$0xff] %vm86, %v269
    %278 = vst.msk [vmem:[#allocation2 + $0x38] sm:$0xff] %vm86, %v270
    %v279 = vld [vmem:[#allocation2] sm:$0xff]
    %v280 = vld [vmem:[#allocation2 + $0x8] sm:$0xff]
    %v281 = vld [vmem:[#allocation2 + $0x10] sm:$0xff]
    %v282 = vld [vmem:[#allocation2 + $0x18] sm:$0xff]
    %v283 = vld [vmem:[#allocation2 + $0x20] sm:$0xff]
    %v284 = vld [vmem:[#allocation2 + $0x28] sm:$0xff]
    %v285 = vld [vmem:[#allocation2 + $0x30] sm:$0xff]
    %v286 = vld [vmem:[#allocation2 + $0x38] sm:$0xff]
    %v287 = vpack.c.bf16 %v279, %v279
    %v288 = vpack.c.bf16 %v280, %v280
    %v289 = vpack.c.bf16 %v281, %v281
    %v290 = vpack.c.bf16 %v282, %v282
    %v291 = vpack.c.bf16 %v283, %v283
    %v292 = vpack.c.bf16 %v284, %v284
    %v293 = vpack.c.bf16 %v285, %v285
    %v294 = vpack.c.bf16 %v286, %v286
    %vm295 = vcmask 125952
    %296 = vst.msk [vmem:[#allocation3] sm:$0xf] %vm295, %v287
    %297 = vst.msk [vmem:[#allocation3 + $0x4] sm:$0xf] %vm295, %v288
    %298 = vst.msk [vmem:[#allocation3 + $0x8] sm:$0xf] %vm295, %v289
    %299 = vst.msk [vmem:[#allocation3 + $0xc] sm:$0xf] %vm295, %v290
    %300 = vst.msk [vmem:[#allocation3 + $0x10] sm:$0xf] %vm295, %v291
    %301 = vst.msk [vmem:[#allocation3 + $0x14] sm:$0xf] %vm295, %v292
    %302 = vst.msk [vmem:[#allocation3 + $0x18] sm:$0xf] %vm295, %v293
    %303 = vst.msk [vmem:[#allocation3 + $0x1c] sm:$0xf] %vm295, %v294
    %v304 = vld [vmem:[#allocation2 + $0x1] sm:$0xff]
    %v305 = vld [vmem:[#allocation2 + $0x9] sm:$0xff]
    %v306 = vld [vmem:[#allocation2 + $0x11] sm:$0xff]
    %v307 = vld [vmem:[#allocation2 + $0x19] sm:$0xff]
    %v308 = vld [vmem:[#allocation2 + $0x21] sm:$0xff]
    %v309 = vld [vmem:[#allocation2 + $0x29] sm:$0xff]
    %v310 = vld [vmem:[#allocation2 + $0x31] sm:$0xff]
    %v311 = vld [vmem:[#allocation2 + $0x39] sm:$0xff]
    %v312 = vpack.c.bf16 %v304, %v304
    %v313 = vpack.c.bf16 %v305, %v305
    %v314 = vpack.c.bf16 %v306, %v306
    %v315 = vpack.c.bf16 %v307, %v307
    %v316 = vpack.c.bf16 %v308, %v308
    %v317 = vpack.c.bf16 %v309, %v309
    %v318 = vpack.c.bf16 %v310, %v310
    %v319 = vpack.c.bf16 %v311, %v311
    %328 = vrot.lane.b32.xlu0 %v312, 16
    %v329 = vpop.permute.xlu0 %328
    %330 = vrot.lane.b32.xlu0 %v313, 16
    %v331 = vpop.permute.xlu0 %330
    %332 = vrot.lane.b32.xlu0 %v314, 16
    %v333 = vpop.permute.xlu0 %332
    %334 = vrot.lane.b32.xlu0 %v315, 16
    %v335 = vpop.permute.xlu0 %334
    %336 = vrot.lane.b32.xlu0 %v316, 16
    %v337 = vpop.permute.xlu0 %336
    %338 = vrot.lane.b32.xlu0 %v317, 16
    %v339 = vpop.permute.xlu0 %338
    %340 = vrot.lane.b32.xlu0 %v318, 16
    %v341 = vpop.permute.xlu0 %340
    %342 = vrot.lane.b32.xlu0 %v319, 16
    %v343 = vpop.permute.xlu0 %342
    %vm352 = vcmask 257152
    %353 = vst.msk [vmem:[#allocation3] sm:$0xf] %vm352, %v329
    %354 = vst.msk [vmem:[#allocation3 + $0x4] sm:$0xf] %vm352, %v331
    %355 = vst.msk [vmem:[#allocation3 + $0x8] sm:$0xf] %vm352, %v333
    %356 = vst.msk [vmem:[#allocation3 + $0xc] sm:$0xf] %vm352, %v335
    %357 = vst.msk [vmem:[#allocation3 + $0x10] sm:$0xf] %vm352, %v337
    %358 = vst.msk [vmem:[#allocation3 + $0x14] sm:$0xf] %vm352, %v339
    %359 = vst.msk [vmem:[#allocation3 + $0x18] sm:$0xf] %vm352, %v341
    %360 = vst.msk [vmem:[#allocation3 + $0x1c] sm:$0xf] %vm352, %v343
    %v361 = vld [vmem:[#allocation2 + $0x2] sm:$0xff]
    %v362 = vld [vmem:[#allocation2 + $0xa] sm:$0xff]
    %v363 = vld [vmem:[#allocation2 + $0x12] sm:$0xff]
    %v364 = vld [vmem:[#allocation2 + $0x1a] sm:$0xff]
    %v365 = vld [vmem:[#allocation2 + $0x22] sm:$0xff]
    %v366 = vld [vmem:[#allocation2 + $0x2a] sm:$0xff]
    %v367 = vld [vmem:[#allocation2 + $0x32] sm:$0xff]
    %v368 = vld [vmem:[#allocation2 + $0x3a] sm:$0xff]
    %v369 = vpack.c.bf16 %v361, %v361
    %v370 = vpack.c.bf16 %v362, %v362
    %v371 = vpack.c.bf16 %v363, %v363
    %v372 = vpack.c.bf16 %v364, %v364
    %v373 = vpack.c.bf16 %v365, %v365
    %v374 = vpack.c.bf16 %v366, %v366
    %v375 = vpack.c.bf16 %v367, %v367
    %v376 = vpack.c.bf16 %v368, %v368
    %385 = vrot.lane.b32.xlu0 %v369, 32
    %v386 = vpop.permute.xlu0 %385
    %387 = vrot.lane.b32.xlu0 %v370, 32
    %v388 = vpop.permute.xlu0 %387
    %389 = vrot.lane.b32.xlu0 %v371, 32
    %v390 = vpop.permute.xlu0 %389
    %391 = vrot.lane.b32.xlu0 %v372, 32
    %v392 = vpop.permute.xlu0 %391
    %393 = vrot.lane.b32.xlu0 %v373, 32
    %v394 = vpop.permute.xlu0 %393
    %395 = vrot.lane.b32.xlu0 %v374, 32
    %v396 = vpop.permute.xlu0 %395
    %397 = vrot.lane.b32.xlu0 %v375, 32
    %v398 = vpop.permute.xlu0 %397
    %399 = vrot.lane.b32.xlu0 %v376, 32
    %v400 = vpop.permute.xlu0 %399
    %vm409 = vcmask 388352
    %410 = vst.msk [vmem:[#allocation3] sm:$0xf] %vm409, %v386
    %411 = vst.msk [vmem:[#allocation3 + $0x4] sm:$0xf] %vm409, %v388
    %412 = vst.msk [vmem:[#allocation3 + $0x8] sm:$0xf] %vm409, %v390
    %413 = vst.msk [vmem:[#allocation3 + $0xc] sm:$0xf] %vm409, %v392
    %414 = vst.msk [vmem:[#allocation3 + $0x10] sm:$0xf] %vm409, %v394
    %415 = vst.msk [vmem:[#allocation3 + $0x14] sm:$0xf] %vm409, %v396
    %416 = vst.msk [vmem:[#allocation3 + $0x18] sm:$0xf] %vm409, %v398
    %417 = vst.msk [vmem:[#allocation3 + $0x1c] sm:$0xf] %vm409, %v400
    %v418 = vld [vmem:[#allocation2 + $0x3] sm:$0xff]
    %v419 = vld [vmem:[#allocation2 + $0xb] sm:$0xff]
    %v420 = vld [vmem:[#allocation2 + $0x13] sm:$0xff]
    %v421 = vld [vmem:[#allocation2 + $0x1b] sm:$0xff]
    %v422 = vld [vmem:[#allocation2 + $0x23] sm:$0xff]
    %v423 = vld [vmem:[#allocation2 + $0x2b] sm:$0xff]
    %v424 = vld [vmem:[#allocation2 + $0x33] sm:$0xff]
    %v425 = vld [vmem:[#allocation2 + $0x3b] sm:$0xff]
    %v426 = vpack.c.bf16 %v418, %v418
    %v427 = vpack.c.bf16 %v419, %v419
    %v428 = vpack.c.bf16 %v420, %v420
    %v429 = vpack.c.bf16 %v421, %v421
    %v430 = vpack.c.bf16 %v422, %v422
    %v431 = vpack.c.bf16 %v423, %v423
    %v432 = vpack.c.bf16 %v424, %v424
    %v433 = vpack.c.bf16 %v425, %v425
    %442 = vrot.lane.b32.xlu0 %v426, 48
    %v443 = vpop.permute.xlu0 %442
    %444 = vrot.lane.b32.xlu0 %v427, 48
    %v445 = vpop.permute.xlu0 %444
    %446 = vrot.lane.b32.xlu0 %v428, 48
    %v447 = vpop.permute.xlu0 %446
    %448 = vrot.lane.b32.xlu0 %v429, 48
    %v449 = vpop.permute.xlu0 %448
    %450 = vrot.lane.b32.xlu0 %v430, 48
    %v451 = vpop.permute.xlu0 %450
    %452 = vrot.lane.b32.xlu0 %v431, 48
    %v453 = vpop.permute.xlu0 %452
    %454 = vrot.lane.b32.xlu0 %v432, 48
    %v455 = vpop.permute.xlu0 %454
    %456 = vrot.lane.b32.xlu0 %v433, 48
    %v457 = vpop.permute.xlu0 %456
    %vm466 = vcmask 519552
    %467 = vst.msk [vmem:[#allocation3] sm:$0xf] %vm466, %v443
    %468 = vst.msk [vmem:[#allocation3 + $0x4] sm:$0xf] %vm466, %v445
    %469 = vst.msk [vmem:[#allocation3 + $0x8] sm:$0xf] %vm466, %v447
    %470 = vst.msk [vmem:[#allocation3 + $0xc] sm:$0xf] %vm466, %v449
    %471 = vst.msk [vmem:[#allocation3 + $0x10] sm:$0xf] %vm466, %v451
    %472 = vst.msk [vmem:[#allocation3 + $0x14] sm:$0xf] %vm466, %v453
    %473 = vst.msk [vmem:[#allocation3 + $0x18] sm:$0xf] %vm466, %v455
    %474 = vst.msk [vmem:[#allocation3 + $0x1c] sm:$0xf] %vm466, %v457
    %v475 = vld [vmem:[#allocation2 + $0x4] sm:$0xff]
    %v476 = vld [vmem:[#allocation2 + $0xc] sm:$0xff]
    %v477 = vld [vmem:[#allocation2 + $0x14] sm:$0xff]
    %v478 = vld [vmem:[#allocation2 + $0x1c] sm:$0xff]
    %v479 = vld [vmem:[#allocation2 + $0x24] sm:$0xff]
    %v480 = vld [vmem:[#allocation2 + $0x2c] sm:$0xff]
    %v481 = vld [vmem:[#allocation2 + $0x34] sm:$0xff]
    %v482 = vld [vmem:[#allocation2 + $0x3c] sm:$0xff]
    %v483 = vpack.c.bf16 %v475, %v475
    %v484 = vpack.c.bf16 %v476, %v476
    %v485 = vpack.c.bf16 %v477, %v477
    %v486 = vpack.c.bf16 %v478, %v478
    %v487 = vpack.c.bf16 %v479, %v479
    %v488 = vpack.c.bf16 %v480, %v480
    %v489 = vpack.c.bf16 %v481, %v481
    %v490 = vpack.c.bf16 %v482, %v482
    %499 = vrot.lane.b32.xlu0 %v483, 64
    %v500 = vpop.permute.xlu0 %499
    %501 = vrot.lane.b32.xlu0 %v484, 64
    %v502 = vpop.permute.xlu0 %501
    %503 = vrot.lane.b32.xlu0 %v485, 64
    %v504 = vpop.permute.xlu0 %503
    %505 = vrot.lane.b32.xlu0 %v486, 64
    %v506 = vpop.permute.xlu0 %505
    %507 = vrot.lane.b32.xlu0 %v487, 64
    %v508 = vpop.permute.xlu0 %507
    %509 = vrot.lane.b32.xlu0 %v488, 64
    %v510 = vpop.permute.xlu0 %509
    %511 = vrot.lane.b32.xlu0 %v489, 64
    %v512 = vpop.permute.xlu0 %511
    %513 = vrot.lane.b32.xlu0 %v490, 64
    %v514 = vpop.permute.xlu0 %513
    %vm523 = vcmask 650752
    %524 = vst.msk [vmem:[#allocation3] sm:$0xf] %vm523, %v500
    %525 = vst.msk [vmem:[#allocation3 + $0x4] sm:$0xf] %vm523, %v502
    %526 = vst.msk [vmem:[#allocation3 + $0x8] sm:$0xf] %vm523, %v504
    %527 = vst.msk [vmem:[#allocation3 + $0xc] sm:$0xf] %vm523, %v506
    %528 = vst.msk [vmem:[#allocation3 + $0x10] sm:$0xf] %vm523, %v508
    %529 = vst.msk [vmem:[#allocation3 + $0x14] sm:$0xf] %vm523, %v510
    %530 = vst.msk [vmem:[#allocation3 + $0x18] sm:$0xf] %vm523, %v512
    %531 = vst.msk [vmem:[#allocation3 + $0x1c] sm:$0xf] %vm523, %v514
    %v532 = vld [vmem:[#allocation3] sm:$0xf]
    %v533 = vld [vmem:[#allocation3 + $0x4] sm:$0xf]
    %v534 = vld [vmem:[#allocation3 + $0x8] sm:$0xf]
    %v535 = vld [vmem:[#allocation3 + $0xc] sm:$0xf]
    %v536 = vld [vmem:[#allocation3 + $0x10] sm:$0xf]
    %v537 = vld [vmem:[#allocation3 + $0x14] sm:$0xf]
    %v538 = vld [vmem:[#allocation3 + $0x18] sm:$0xf]
    %v539 = vld [vmem:[#allocation3 + $0x1c] sm:$0xf]
    %v540 = vld [vmem:[%s1 + $0x10] sm:$0xf]
    %v541 = vld [vmem:[%s1 + $0x18] sm:$0xf]
    %v542 = vld [vmem:[%s1 + $0x20] sm:$0xf]
    %v543 = vld [vmem:[%s1 + $0x28] sm:$0xf]
    %v544 = vld [vmem:[%s1 + $0x30] sm:$0xf]
    %v545 = vld [vmem:[%s1 + $0x38] sm:$0xf]
    %v546 = vld [vmem:[%s1 + $0x40] sm:$0xf]
    %v547 = vld [vmem:[%s1 + $0x48] sm:$0xf]
    %v548 = vld [vmem:[%s1 + $0x50] sm:$0xf]
    %v549 = vld [vmem:[%s1 + $0x58] sm:$0xf]
    %v550 = vld [vmem:[%s2 + $0x1] ss:$0 sm:$0xff]
    %v559 = vunpack.c.l.b16 %v532
    %v560 = vunpack.c.l.b16 %v533
    %v561 = vunpack.c.l.b16 %v534
    %v562 = vunpack.c.l.b16 %v535
    %v563 = vunpack.c.l.b16 %v536
    %v564 = vunpack.c.l.b16 %v537
    %v565 = vunpack.c.l.b16 %v538
    %v566 = vunpack.c.l.b16 %v539
    %v567 = vpack.c.b16 %v560, %v559
    %v568 = vpack.c.b16 %v562, %v561
    %v569 = vpack.c.b16 %v564, %v563
    %v570 = vpack.c.b16 %v566, %v565
    %v581 = vunpack.c.l.b16 %v540
    %v582 = vunpack.c.l.b16 %v541
    %v583 = vunpack.c.l.b16 %v542
    %v584 = vunpack.c.l.b16 %v543
    %v585 = vunpack.c.l.b16 %v544
    %v586 = vunpack.c.l.b16 %v545
    %v587 = vunpack.c.l.b16 %v546
    %v588 = vunpack.c.l.b16 %v547
    %v589 = vunpack.c.l.b16 %v548
    %v590 = vunpack.c.l.b16 %v549
    %v591 = vpack.c.b16 %v582, %v581
    %v592 = vpack.c.b16 %v584, %v583
    %v593 = vpack.c.b16 %v586, %v585
    %v594 = vpack.c.b16 %v588, %v587
    %v595 = vpack.c.b16 %v590, %v589
    %vm601 = vcmask 654336
    %v603 = vsel %vm601, %v567, 0
    %v606 = vsel %vm601, %v568, 0
    %v609 = vsel %vm601, %v569, 0
    %v612 = vsel %vm601, %v570, 0
    %614 = vmatpush.bf16.msra.mxu0 0
    %615 = vmatpush.bf16.msra.mxu0 0
    %616 = vmatpush.bf16.msra.mxu0 0
    %617 = vmatpush.bf16.msra.mxu0 %v595
    %618 = vmatpush.bf16.msra.mxu0 %v594
    %619 = vmatpush.bf16.msra.mxu0 %v593
    %620 = vmatpush.bf16.msra.mxu0 %v592
    %621 = vmatpush.bf16.msra.mxu0 %v591
    %622 = vmatmul.bf16.gmra.mxu0 %v603
    %v623 = vpop.f32.mrf.mxu0
    %v624 = vadd.f32 %v550, %v623
    %v625 = vpop.f32.mrf.mxu0
    %v626 = vadd.f32 %v550, %v625
    %627 = vmatmul.bf16.gmra.mxu0 %v606
    %v628 = vpop.f32.mrf.mxu0
    %v629 = vadd.f32 %v550, %v628
    %v630 = vpop.f32.mrf.mxu0
    %v631 = vadd.f32 %v550, %v630
    %632 = vmatmul.bf16.gmra.mxu0 %v609
    %v633 = vpop.f32.mrf.mxu0
    %v634 = vadd.f32 %v550, %v633
    %v635 = vpop.f32.mrf.mxu0
    %v636 = vadd.f32 %v550, %v635
    %637 = vmatmul.bf16.gmra.mxu0 %v612
    %v638 = vpop.f32.mrf.mxu0
    %v639 = vadd.f32 %v550, %v638
    %v640 = vpop.f32.mrf.mxu0
    %v641 = vadd.f32 %v550, %v640
    %642 = vdwg.mxu0
    %v643 = vmax.f32 %v624, 0.0
    %v644 = vmax.f32 %v626, 0.0
    %v645 = vmax.f32 %v629, 0.0
    %v646 = vmax.f32 %v631, 0.0
    %v647 = vmax.f32 %v634, 0.0
    %v648 = vmax.f32 %v636, 0.0
    %v649 = vmax.f32 %v639, 0.0
    %v650 = vmax.f32 %v641, 0.0
    %651 = vst.msk [vmem:[#allocation4] sm:$0xff] %vm96, %v643
    %652 = vst.msk [vmem:[#allocation4 + $0x8] sm:$0xff] %vm96, %v644
    %653 = vst.msk [vmem:[#allocation4 + $0x10] sm:$0xff] %vm96, %v645
    %654 = vst.msk [vmem:[#allocation4 + $0x18] sm:$0xff] %vm96, %v646
    %655 = vst.msk [vmem:[#allocation4 + $0x20] sm:$0xff] %vm96, %v647
    %656 = vst.msk [vmem:[#allocation4 + $0x28] sm:$0xff] %vm96, %v648
    %657 = vst.msk [vmem:[#allocation4 + $0x30] sm:$0xff] %vm96, %v649
    %658 = vst.msk [vmem:[#allocation4 + $0x38] sm:$0xff] %vm96, %v650
    %v659 = vld [vmem:[#allocation4] ss:$2 sm:$0xff]
    %s660 = scalar_lea.vmem [#allocation4], 16
    %v661 = vld [vmem:[%s660] ss:$2 sm:$0xff]
    %s662 = scalar_lea.vmem [#allocation4], 32
    %v663 = vld [vmem:[%s662] ss:$2 sm:$0xff]
    %s664 = scalar_lea.vmem [#allocation4], 48
    %v665 = vld [vmem:[%s664] ss:$2 sm:$0xff]
    %s666 = scalar_lea.vmem [#allocation4], 1
    %v667 = vld [vmem:[%s666] ss:$2 sm:$0xff]
    %s668 = scalar_lea.vmem [#allocation4], 17
    %v669 = vld [vmem:[%s668] ss:$2 sm:$0xff]
    %s670 = scalar_lea.vmem [#allocation4], 33
    %v671 = vld [vmem:[%s670] ss:$2 sm:$0xff]
    %s672 = scalar_lea.vmem [#allocation4], 49
    %v673 = vld [vmem:[%s672] ss:$2 sm:$0xff]
    %v674 = vmax.f32 %v659, %v667
    %v675 = vmax.f32 %v661, %v669
    %v676 = vmax.f32 %v663, %v671
    %v677 = vmax.f32 %v665, %v673
    %v678 = vsel %vm82, 1, 0
    %v679 = vsel %vm83, 1, 0
    %v680 = vsel %vm84, 1, 0
    %v681 = vsel %vm85, 1, 0
    %vm682 = vcmp.eq.s32.totalorder %v678, 1
    %vm683 = vcmp.eq.s32.totalorder %v679, 1
    %vm684 = vcmp.eq.s32.totalorder %v680, 1
    %vm685 = vcmp.eq.s32.totalorder %v681, 1
    %v686 = vsel %vm682, %v674, 0.0
    %v687 = vsel %vm683, %v675, 0.0
    %v688 = vsel %vm684, %v676, 0.0
    %v689 = vsel %vm685, %v677, 0.0
    %690 = vst.msk [vmem:[#allocation5 + $0x2] sm:$0xff] %vm96, %v686
    %691 = vst.msk [vmem:[#allocation5 + $0xa] sm:$0xff] %vm96, %v687
    %692 = vst.msk [vmem:[#allocation5 + $0x12] sm:$0xff] %vm96, %v688
    %693 = vst.msk [vmem:[#allocation5 + $0x1a] sm:$0xff] %vm96, %v689
    %v694 = vld [vmem:[#allocation5 + $0x2] sm:$0xff]
    %v695 = vld [vmem:[#allocation5 + $0xa] sm:$0xff]
    %v696 = vld [vmem:[#allocation5 + $0x12] sm:$0xff]
    %v697 = vld [vmem:[#allocation5 + $0x1a] sm:$0xff]
    %v698 = vld [vmem:[#allocation5] sm:$0xff]
    %v699 = vld [vmem:[#allocation5 + $0x8] sm:$0xff]
    %v700 = vld [vmem:[#allocation5 + $0x10] sm:$0xff]
    %v701 = vld [vmem:[#allocation5 + $0x18] sm:$0xff]
    %v702 = vld [vmem:[#allocation5 + $0x1] sm:$0xff]
    %v703 = vld [vmem:[#allocation5 + $0x9] sm:$0xff]
    %v704 = vld [vmem:[#allocation5 + $0x11] sm:$0xff]
    %v705 = vld [vmem:[#allocation5 + $0x19] sm:$0xff]
    %v706 = vld [vmem:[#allocation5 + $0x3] sm:$0xff]
    %v707 = vld [vmem:[#allocation5 + $0xb] sm:$0xff]
    %v708 = vld [vmem:[#allocation5 + $0x13] sm:$0xff]
    %v709 = vld [vmem:[#allocation5 + $0x1b] sm:$0xff]
    %v710 = vld [vmem:[#allocation5 + $0x4] sm:$0xff]
    %v711 = vld [vmem:[#allocation5 + $0xc] sm:$0xff]
    %v712 = vld [vmem:[#allocation5 + $0x14] sm:$0xff]
    %v713 = vld [vmem:[#allocation5 + $0x1c] sm:$0xff]
    %vm719 = vcmask 1046528
    %v720 = vrot.slane %v77, 1
    %v721 = vrot.slane %v78, 1
    %v722 = vsel %vm719, %v720, %v721
    %v723 = vrot.slane %v79, 1
    %v724 = vsel %vm719, %v721, %v723
    %v725 = vrot.slane %v80, 1
    %v726 = vsel %vm719, %v723, %v725
    %v727 = vrot.slane %v81, 1
    %v728 = vsel %vm719, %v725, %v727
    %v733 = vadd.f32 %v702, %v722
    %v734 = vadd.f32 %v703, %v724
    %v735 = vadd.f32 %v704, %v726
    %v736 = vadd.f32 %v705, %v728
    %vm737 = vcmask 1045504
    %v738 = vrot.slane %v77, 2
    %v739 = vrot.slane %v78, 2
    %v740 = vsel %vm737, %v738, %v739
    %v741 = vrot.slane %v79, 2
    %v742 = vsel %vm737, %v739, %v741
    %v743 = vrot.slane %v80, 2
    %v744 = vsel %vm737, %v741, %v743
    %v745 = vrot.slane %v81, 2
    %v746 = vsel %vm737, %v743, %v745
    %v751 = vadd.f32 %v694, %v740
    %v752 = vadd.f32 %v695, %v742
    %v753 = vadd.f32 %v696, %v744
    %v754 = vadd.f32 %v697, %v746
    %v755 = vmax.f32 %v733, %v751
    %v756 = vmax.f32 %v734, %v752
    %v757 = vmax.f32 %v735, %v753
    %v758 = vmax.f32 %v736, %v754
    %vm759 = vcmask 1044480
    %v760 = vrot.slane %v77, 3
    %v761 = vrot.slane %v78, 3
    %v762 = vsel %vm759, %v760, %v761
    %v763 = vrot.slane %v79, 3
    %v764 = vsel %vm759, %v761, %v763
    %v765 = vrot.slane %v80, 3
    %v766 = vsel %vm759, %v763, %v765
    %v767 = vrot.slane %v81, 3
    %v768 = vsel %vm759, %v765, %v767
    %v773 = vadd.f32 %v706, %v762
    %v774 = vadd.f32 %v707, %v764
    %v775 = vadd.f32 %v708, %v766
    %v776 = vadd.f32 %v709, %v768
    %v777 = vmax.f32 %v755, %v773
    %v778 = vmax.f32 %v756, %v774
    %v779 = vmax.f32 %v757, %v775
    %v780 = vmax.f32 %v758, %v776
    %v781 = vpack.c.bf16 %v694, %v694
    %v782 = vpack.c.bf16 %v695, %v695
    %v783 = vpack.c.bf16 %v696, %v696
    %v784 = vpack.c.bf16 %v697, %v697
    %vm785 = vcmask 257024
    %786 = vst.msk [vmem:[#allocation6] sm:$0xf] %vm785, %v781
    %787 = vst.msk [vmem:[#allocation6 + $0x8] sm:$0xf] %vm785, %v782
    %788 = vst.msk [vmem:[#allocation6 + $0x10] sm:$0xf] %vm785, %v783
    %789 = vst.msk [vmem:[#allocation6 + $0x18] sm:$0xf] %vm785, %v784
    %v790 = vpack.c.bf16 %v698, %v698
    %v791 = vpack.c.bf16 %v699, %v699
    %v792 = vpack.c.bf16 %v700, %v700
    %v793 = vpack.c.bf16 %v701, %v701
    %798 = vrot.lane.b32.xlu0 %v790, 32
    %v799 = vpop.permute.xlu0 %798
    %800 = vrot.lane.b32.xlu0 %v791, 32
    %v801 = vpop.permute.xlu0 %800
    %802 = vrot.lane.b32.xlu0 %v792, 32
    %v803 = vpop.permute.xlu0 %802
    %804 = vrot.lane.b32.xlu0 %v793, 32
    %v805 = vpop.permute.xlu0 %804
    %vm810 = vcmask 519424
    %811 = vst.msk [vmem:[#allocation6] sm:$0xf] %vm810, %v799
    %812 = vst.msk [vmem:[#allocation6 + $0x8] sm:$0xf] %vm810, %v801
    %813 = vst.msk [vmem:[#allocation6 + $0x10] sm:$0xf] %vm810, %v803
    %814 = vst.msk [vmem:[#allocation6 + $0x18] sm:$0xf] %vm810, %v805
    %v815 = vpack.c.bf16 %v702, %v702
    %v816 = vpack.c.bf16 %v703, %v703
    %v817 = vpack.c.bf16 %v704, %v704
    %v818 = vpack.c.bf16 %v705, %v705
    %823 = vrot.lane.b32.xlu0 %v815, 64
    %v824 = vpop.permute.xlu0 %823
    %825 = vrot.lane.b32.xlu0 %v816, 64
    %v826 = vpop.permute.xlu0 %825
    %827 = vrot.lane.b32.xlu0 %v817, 64
    %v828 = vpop.permute.xlu0 %827
    %829 = vrot.lane.b32.xlu0 %v818, 64
    %v830 = vpop.permute.xlu0 %829
    %vm835 = vcmask 781824
    %836 = vst.msk [vmem:[#allocation6] sm:$0xf] %vm835, %v824
    %837 = vst.msk [vmem:[#allocation6 + $0x8] sm:$0xf] %vm835, %v826
    %838 = vst.msk [vmem:[#allocation6 + $0x10] sm:$0xf] %vm835, %v828
    %839 = vst.msk [vmem:[#allocation6 + $0x18] sm:$0xf] %vm835, %v830
    %v840 = vpack.c.bf16 %v706, %v706
    %v841 = vpack.c.bf16 %v707, %v707
    %v842 = vpack.c.bf16 %v708, %v708
    %v843 = vpack.c.bf16 %v709, %v709
    %848 = vrot.lane.b32.xlu0 %v840, 96
    %v849 = vpop.permute.xlu0 %848
    %850 = vrot.lane.b32.xlu0 %v841, 96
    %v851 = vpop.permute.xlu0 %850
    %852 = vrot.lane.b32.xlu0 %v842, 96
    %v853 = vpop.permute.xlu0 %852
    %854 = vrot.lane.b32.xlu0 %v843, 96
    %v855 = vpop.permute.xlu0 %854
    %vm860 = vcmask 1044224
    %861 = vst.msk [vmem:[#allocation6] sm:$0xf] %vm860, %v849
    %862 = vst.msk [vmem:[#allocation6 + $0x8] sm:$0xf] %vm860, %v851
    %863 = vst.msk [vmem:[#allocation6 + $0x10] sm:$0xf] %vm860, %v853
    %864 = vst.msk [vmem:[#allocation6 + $0x18] sm:$0xf] %vm860, %v855
    %v865 = vpack.c.bf16 %v710, %v710
    %v866 = vpack.c.bf16 %v711, %v711
    %v867 = vpack.c.bf16 %v712, %v712
    %v868 = vpack.c.bf16 %v713, %v713
    %869 = vst.msk [vmem:[#allocation6 + $0x4] sm:$0xf] %vm785, %v865
    %870 = vst.msk [vmem:[#allocation6 + $0xc] sm:$0xf] %vm785, %v866
    %871 = vst.msk [vmem:[#allocation6 + $0x14] sm:$0xf] %vm785, %v867
    %872 = vst.msk [vmem:[#allocation6 + $0x1c] sm:$0xf] %vm785, %v868
    %v873 = vpack.c.bf16 %v777, %v777
    %v874 = vpack.c.bf16 %v778, %v778
    %v875 = vpack.c.bf16 %v779, %v779
    %v876 = vpack.c.bf16 %v780, %v780
    %881 = vrot.lane.b32.xlu0 %v873, 32
    %v882 = vpop.permute.xlu0 %881
    %883 = vrot.lane.b32.xlu0 %v874, 32
    %v884 = vpop.permute.xlu0 %883
    %885 = vrot.lane.b32.xlu0 %v875, 32
    %v886 = vpop.permute.xlu0 %885
    %887 = vrot.lane.b32.xlu0 %v876, 32
    %v888 = vpop.permute.xlu0 %887
    %893 = vst.msk [vmem:[#allocation6 + $0x4] sm:$0xf] %vm810, %v882
    %894 = vst.msk [vmem:[#allocation6 + $0xc] sm:$0xf] %vm810, %v884
    %895 = vst.msk [vmem:[#allocation6 + $0x14] sm:$0xf] %vm810, %v886
    %896 = vst.msk [vmem:[#allocation6 + $0x1c] sm:$0xf] %vm810, %v888
    %v897 = vld [vmem:[#allocation6] sm:$0xff]
    %v898 = vld [vmem:[#allocation6 + $0x8] sm:$0xff]
    %v899 = vld [vmem:[#allocation6 + $0x10] sm:$0xff]
    %v900 = vld [vmem:[#allocation6 + $0x18] sm:$0xff]
    %v901 = vld [vmem:[%s1 + $0x60] sm:$0xf]
    %v902 = vld [vmem:[%s1 + $0x68] sm:$0xf]
    %v903 = vld [vmem:[%s1 + $0x70] sm:$0xf]
    %v904 = vld [vmem:[%s1 + $0x78] sm:$0xf]
    %v905 = vld [vmem:[%s1 + $0x80] sm:$0xf]
    %v906 = vld [vmem:[%s1 + $0x88] sm:$0xf]
    %v907 = vld [vmem:[%s1 + $0x90] sm:$0xf]
    %v908 = vld [vmem:[%s1 + $0x98] sm:$0xf]
    %v909 = vld [vmem:[%s1 + $0xa0] sm:$0xf]
    %v910 = vld [vmem:[%s1 + $0xa8] sm:$0xf]
    %v911 = vld [vmem:[%s1 + $0xb0] sm:$0xf]
    %v912 = vld [vmem:[%s1 + $0xb8] sm:$0xf]
    %v913 = vld [vmem:[%s1 + $0xc0] sm:$0xf]
    %v914 = vld [vmem:[%s1 + $0xc8] sm:$0xf]
    %v915 = vld [vmem:[%s1 + $0xd0] sm:$0xf]
    %v916 = vld [vmem:[%s1 + $0xd8] sm:$0xf]
    %v917 = vld [vmem:[%s1 + $0xe0] sm:$0xf]
    %v918 = vld [vmem:[%s1 + $0xe8] sm:$0xf]
    %v919 = vld [vmem:[%s1 + $0xf0] sm:$0xf]
    %v920 = vld [vmem:[%s1 + $0xf8] sm:$0xf]
    %v921 = vld [vmem:[%s1 + $0x100] sm:$0xf]
    %v922 = vld [vmem:[%s1 + $0x108] sm:$0xf]
    %v923 = vld [vmem:[%s1 + $0x110] sm:$0xf]
    %v924 = vld [vmem:[%s1 + $0x118] sm:$0xf]
    %v925 = vld [vmem:[%s2 + $0x2] ss:$0 sm:$0xff]
    %v930 = vunpack.c.l.b16 %v897
    %v931 = vunpack.c.h.b16 %v897
    %v932 = vunpack.c.l.b16 %v898
    %v933 = vunpack.c.h.b16 %v898
    %v934 = vunpack.c.l.b16 %v899
    %v935 = vunpack.c.h.b16 %v899
    %v936 = vunpack.c.l.b16 %v900
    %v937 = vunpack.c.h.b16 %v900
    %v938 = vpack.c.b16 %v932, %v930
    %v939 = vpack.c.b16 %v933, %v931
    %v940 = vpack.c.b16 %v936, %v934
    %v941 = vpack.c.b16 %v937, %v935
    %v968 = vunpack.c.l.b16 %v901
    %v969 = vunpack.c.l.b16 %v902
    %v970 = vunpack.c.l.b16 %v903
    %v971 = vunpack.c.l.b16 %v904
    %v972 = vunpack.c.l.b16 %v905
    %v973 = vunpack.c.l.b16 %v906
    %v974 = vunpack.c.l.b16 %v907
    %v975 = vunpack.c.l.b16 %v908
    %v976 = vunpack.c.l.b16 %v909
    %v977 = vunpack.c.l.b16 %v910
    %v978 = vunpack.c.l.b16 %v911
    %v979 = vunpack.c.l.b16 %v912
    %v980 = vunpack.c.l.b16 %v913
    %v981 = vunpack.c.l.b16 %v914
    %v982 = vunpack.c.l.b16 %v915
    %v983 = vunpack.c.l.b16 %v916
    %v984 = vunpack.c.l.b16 %v917
    %v985 = vunpack.c.l.b16 %v918
    %v986 = vunpack.c.l.b16 %v919
    %v987 = vunpack.c.l.b16 %v920
    %v988 = vunpack.c.l.b16 %v921
    %v989 = vunpack.c.l.b16 %v922
    %v990 = vunpack.c.l.b16 %v923
    %v991 = vunpack.c.l.b16 %v924
    %v992 = vpack.c.b16 %v969, %v968
    %v993 = vpack.c.b16 %v971, %v970
    %v994 = vpack.c.b16 %v973, %v972
    %v995 = vpack.c.b16 %v975, %v974
    %v996 = vpack.c.b16 %v977, %v976
    %v997 = vpack.c.b16 %v979, %v978
    %v998 = vpack.c.b16 %v981, %v980
    %v999 = vpack.c.b16 %v983, %v982
    %v1000 = vpack.c.b16 %v985, %v984
    %v1001 = vpack.c.b16 %v987, %v986
    %v1002 = vpack.c.b16 %v989, %v988
    %v1003 = vpack.c.b16 %v991, %v990
    %v1017 = vsel %vm102, %v939, 0
    %v1020 = vsel %vm102, %v941, 0
    %1022 = vmatpush.bf16.msra.mxu0 %v999
    %1023 = vmatpush.bf16.msra.mxu0 %v998
    %1024 = vmatpush.bf16.msra.mxu0 %v997
    %1025 = vmatpush.bf16.msra.mxu0 %v996
    %1026 = vmatpush.bf16.msra.mxu0 %v995
    %1027 = vmatpush.bf16.msra.mxu0 %v994
    %1028 = vmatpush.bf16.msra.mxu0 %v993
    %1029 = vmatpush.bf16.msra.mxu0 %v992
    %1030 = vmatmul.bf16.gmra.mxu0 %v938
    %v1031 = vpop.f32.mrf.mxu0
    %v1032 = vadd.f32 %v925, %v1031
    %v1033 = vpop.f32.mrf.mxu0
    %v1034 = vadd.f32 %v925, %v1033
    %1035 = vmatmul.bf16.gmra.mxu0 %v940
    %v1036 = vpop.f32.mrf.mxu0
    %v1037 = vadd.f32 %v925, %v1036
    %v1038 = vpop.f32.mrf.mxu0
    %v1039 = vadd.f32 %v925, %v1038
    %1040 = vdwg.mxu0
    %1041 = vmatpush.bf16.msra.mxu0 0
    %1042 = vmatpush.bf16.msra.mxu0 0
    %1043 = vmatpush.bf16.msra.mxu0 0
    %1044 = vmatpush.bf16.msra.mxu0 0
    %1045 = vmatpush.bf16.msra.mxu0 %v1003
    %1046 = vmatpush.bf16.msra.mxu0 %v1002
    %1047 = vmatpush.bf16.msra.mxu0 %v1001
    %1048 = vmatpush.bf16.msra.mxu0 %v1000
    %1049 = vmatmul.bf16.gmra.mxu0 %v1017
    %v1050 = vpop.f32.mrf.mxu0
    %v1051 = vadd.f32 %v1032, %v1050
    %v1052 = vpop.f32.mrf.mxu0
    %v1053 = vadd.f32 %v1034, %v1052
    %1054 = vmatmul.bf16.gmra.mxu0 %v1020
    %v1055 = vpop.f32.mrf.mxu0
    %v1056 = vadd.f32 %v1037, %v1055
    %v1057 = vpop.f32.mrf.mxu0
    %v1058 = vadd.f32 %v1039, %v1057
    %1059 = vdwg.mxu0
    %v1060 = vmax.f32 %v1051, 0.0
    %v1061 = vmax.f32 %v1053, 0.0
    %v1062 = vmax.f32 %v1056, 0.0
    %v1063 = vmax.f32 %v1058, 0.0
    %v1064 = vld [vmem:[%s1 + $0x440] sm:$0x1]
    %v1065 = vpack.c.bf16 %v1061, %v1060
    %v1066 = vpack.c.bf16 %v1063, %v1062
    %v1068 = vsel %vm96, %v1064, 0
    %1070 = vmatpush.bf16.msra.mxu0 0
    %1071 = vmatpush.bf16.msra.mxu0 0
    %1072 = vmatpush.bf16.msra.mxu0 0
    %1073 = vmatpush.bf16.msra.mxu0 0
    %1074 = vmatpush.bf16.msra.mxu0 0
    %1075 = vmatpush.bf16.msra.mxu0 0
    %1076 = vmatpush.bf16.msra.mxu0 %v1066
    %1077 = vmatpush.bf16.msra.mxu0 %v1065
    %1078 = vmatmul.bf16.gmra.mxu0 %v1068
    %v1079 = vpop.f32.mrf.mxu0
    %v1080 = vadd.f32 0.0, %v1079
    %v1081 = vpop.f32.mrf.mxu0
    %1082 = vdwg.mxu0
    %v1083 = vmul.f32 %v1080, 0.07692308
    %v1084 = vpack.c.bf16 %v1083, %v1083
    %v1085 = vld [vmem:[%s1 + $0x2a0] sm:$0xf]
    %v1086 = vld [vmem:[%s1 + $0x2a8] sm:$0xf]
    %v1087 = vld [vmem:[%s1 + $0x2b0] sm:$0xf]
    %v1088 = vld [vmem:[%s1 + $0x2b8] sm:$0xf]
    %v1089 = vld [vmem:[%s1 + $0x2c0] sm:$0xf]
    %v1090 = vld [vmem:[%s1 + $0x2c8] sm:$0xf]
    %v1091 = vld [vmem:[%s1 + $0x2d0] sm:$0xf]
    %v1092 = vld [vmem:[%s1 + $0x2d8] sm:$0xf]
    %v1093 = vld [vmem:[%s2 + $0x3] ss:$0 sm:$0xff]
    %v1102 = vunpack.c.l.b16 %v1085
    %v1103 = vunpack.c.l.b16 %v1086
    %v1104 = vunpack.c.l.b16 %v1087
    %v1105 = vunpack.c.l.b16 %v1088
    %v1106 = vunpack.c.l.b16 %v1089
    %v1107 = vunpack.c.l.b16 %v1090
    %v1108 = vunpack.c.l.b16 %v1091
    %v1109 = vunpack.c.l.b16 %v1092
    %v1110 = vpack.c.b16 %v1103, %v1102
    %v1111 = vpack.c.b16 %v1105, %v1104
    %v1112 = vpack.c.b16 %v1107, %v1106
    %v1113 = vpack.c.b16 %v1109, %v1108
    %v1119 = vsel %vm102, %v1084, 0
    %1121 = vmatpush.bf16.msra.mxu0 0
    %1122 = vmatpush.bf16.msra.mxu0 0
    %1123 = vmatpush.bf16.msra.mxu0 0
    %1124 = vmatpush.bf16.msra.mxu0 0
    %1125 = vmatpush.bf16.msra.mxu0 %v1113
    %1126 = vmatpush.bf16.msra.mxu0 %v1112
    %1127 = vmatpush.bf16.msra.mxu0 %v1111
    %1128 = vmatpush.bf16.msra.mxu0 %v1110
    %1129 = vmatmul.bf16.gmra.mxu0 %v1119
    %v1130 = vpop.f32.mrf.mxu0
    %v1131 = vadd.f32 %v1093, %v1130
    %v1132 = vpop.f32.mrf.mxu0
    %1133 = vdwg.mxu0
    %v1134 = vmax.f32 %v1131, 0.0
    %v1135 = vpack.c.bf16 %v1134, %v1134
    %v1136 = vld [vmem:[%s1 + $0x2e0] sm:$0x3]
    %v1137 = vld [vmem:[%s2 + $0x4] ss:$0 sm:$0xff]
    %vm1138 = vcmask 31744
    %v1140 = vsel %vm1138, %v1135, 0
    %v1143 = vsel %vm191, %v1136, 0
    %1145 = vmatpush.bf16.msra.mxu0 0
    %1146 = vmatpush.bf16.msra.mxu0 0
    %1147 = vmatpush.bf16.msra.mxu0 0
    %1148 = vmatpush.bf16.msra.mxu0 0
    %1149 = vmatpush.bf16.msra.mxu0 0
    %1150 = vmatpush.bf16.msra.mxu0 0
    %1151 = vmatpush.bf16.msra.mxu0 0
    %1152 = vmatpush.bf16.msra.mxu0 %v1143
    %1153 = vmatmul.bf16.gmra.mxu0 %v1140
    %v1154 = vpop.f32.mrf.mxu0
    %v1155 = vadd.f32 %v1137, %v1154
    %v1156 = vpop.f32.mrf.mxu0
    %1157 = vdwg.mxu0
    %v1158 = vsub.f32 0.0, %v1155
    %v1159 = vmul.f32 %v1158, 1.442695
    %v1160 = vpow.pop %v1159
    %v1161 = vadd.f32 %v1160, 1.0
    %v1162 = vrcp.pop %v1161
    %v1163 = vmul.f32 %v1161, %v1162
    %v1164 = vsub.f32 1.0, %v1163
    %v1165 = vmul.f32 %v1162, %v1164
    %v1166 = vadd.f32 %v1162, %v1165
    %vm1167 = vweird.f32 %v1161
    %vm1168 = vweird.f32 %v1162
    %vm1169 = vmor %vm1167, %vm1168
    %v1170 = vsel %vm1169, %v1162, %v1166
    %v1171 = vand.u32 2147483647, %v1161
    %vm1172 = vcmp.eq.f32.partialorder %v1171, 8.507059e+37
    %v1173 = vand.u32 %v1161, 2147483648
    %v1174 = vor.u32 1.1754944e-38, %v1173
    %v1175 = vsel %vm1172, %v1174, %v1170
    %v1176 = vmul.f32 1.0, %v1175
    %v1177 = vld [vmem:[%s1 + $0x450] sm:$0xf]
    %v1178 = vld [vmem:[%s1 + $0x458] sm:$0xf]
    %v1179 = vld [vmem:[%s1 + $0x460] sm:$0xf]
    %v1180 = vld [vmem:[%s1 + $0x468] sm:$0xf]
    %v1181 = vpack.c.bf16 %v1176, %v1176
    %v1186 = vunpack.c.l.b16 %v1177
    %v1187 = vunpack.c.l.b16 %v1178
    %v1188 = vunpack.c.l.b16 %v1179
    %v1189 = vunpack.c.l.b16 %v1180
    %v1190 = vpack.c.b16 %v1187, %v1186
    %v1191 = vpack.c.b16 %v1189, %v1188
    %vm1192 = vcmask 15360
    %v1194 = vsel %vm1192, %v1190, 0
    %v1197 = vsel %vm1192, %v1191, 0
    %vm1199 = vcmask 1040384
    %v1201 = vsel %vm1199, %v1181, 0
    %1203 = vmatpush.bf16.msra.mxu0 0
    %1204 = vmatpush.bf16.msra.mxu0 0
    %1205 = vmatpush.bf16.msra.mxu0 0
    %1206 = vmatpush.bf16.msra.mxu0 0
    %1207 = vmatpush.bf16.msra.mxu0 0
    %1208 = vmatpush.bf16.msra.mxu0 0
    %1209 = vmatpush.bf16.msra.mxu0 0
    %1210 = vmatpush.bf16.msra.mxu0 %v1201
    %1211 = vmatmul.bf16.gmra.mxu0 %v1194
    %v1212 = vpop.f32.mrf.mxu0
    %v1213 = vadd.f32 0.0, %v1212
    %v1214 = vpop.f32.mrf.mxu0
    %v1215 = vadd.f32 0.0, %v1214
    %1216 = vmatmul.bf16.gmra.mxu0 %v1197
    %v1217 = vpop.f32.mrf.mxu0
    %v1218 = vadd.f32 0.0, %v1217
    %v1219 = vpop.f32.mrf.mxu0
    %v1220 = vadd.f32 0.0, %v1219
    %1221 = vdwg.mxu0
    %v1222 = vmul.f32 %v1060, %v1213
    %v1223 = vmul.f32 %v1061, %v1215
    %v1224 = vmul.f32 %v1062, %v1218
    %v1225 = vmul.f32 %v1063, %v1220
    %1230 = vrot.lane.b32.xlu0 %v1051, 64
    %v1231 = vpop.permute.xlu0 %1230
    %1232 = vrot.lane.b32.xlu0 %v1053, 64
    %v1233 = vpop.permute.xlu0 %1232
    %1234 = vrot.lane.b32.xlu0 %v1056, 64
    %v1235 = vpop.permute.xlu0 %1234
    %1236 = vrot.lane.b32.xlu0 %v1058, 64
    %v1237 = vpop.permute.xlu0 %1236
    %v1242 = vadd.f32 %v1222, %v1231
    %v1243 = vadd.f32 %v1223, %v1233
    %v1244 = vadd.f32 %v1224, %v1235
    %v1245 = vadd.f32 %v1225, %v1237
    %v1246 = vsel %vm682, %v1242, 0.0
    %v1247 = vsel %vm683, %v1243, 0.0
    %v1248 = vsel %vm684, %v1244, 0.0
    %v1249 = vsel %vm685, %v1245, 0.0
    %1250 = vst.msk [vmem:[#allocation7 + $0x2] sm:$0xff] %vm102, %v1246
    %1251 = vst.msk [vmem:[#allocation7 + $0xa] sm:$0xff] %vm102, %v1247
    %1252 = vst.msk [vmem:[#allocation7 + $0x12] sm:$0xff] %vm102, %v1248
    %1253 = vst.msk [vmem:[#allocation7 + $0x1a] sm:$0xff] %vm102, %v1249
    %v1254 = vld [vmem:[#allocation7 + $0x2] sm:$0xff]
    %v1255 = vld [vmem:[#allocation7 + $0xa] sm:$0xff]
    %v1256 = vld [vmem:[#allocation7 + $0x12] sm:$0xff]
    %v1257 = vld [vmem:[#allocation7 + $0x1a] sm:$0xff]
    %v1258 = vld [vmem:[#allocation7] sm:$0xff]
    %v1259 = vld [vmem:[#allocation7 + $0x8] sm:$0xff]
    %v1260 = vld [vmem:[#allocation7 + $0x10] sm:$0xff]
    %v1261 = vld [vmem:[#allocation7 + $0x18] sm:$0xff]
    %v1262 = vld [vmem:[#allocation7 + $0x1] sm:$0xff]
    %v1263 = vld [vmem:[#allocation7 + $0x9] sm:$0xff]
    %v1264 = vld [vmem:[#allocation7 + $0x11] sm:$0xff]
    %v1265 = vld [vmem:[#allocation7 + $0x19] sm:$0xff]
    %v1266 = vld [vmem:[#allocation7 + $0x3] sm:$0xff]
    %v1267 = vld [vmem:[#allocation7 + $0xb] sm:$0xff]
    %v1268 = vld [vmem:[#allocation7 + $0x13] sm:$0xff]
    %v1269 = vld [vmem:[#allocation7 + $0x1b] sm:$0xff]
    %v1270 = vld [vmem:[#allocation7 + $0x4] sm:$0xff]
    %v1271 = vld [vmem:[#allocation7 + $0xc] sm:$0xff]
    %v1272 = vld [vmem:[#allocation7 + $0x14] sm:$0xff]
    %v1273 = vld [vmem:[#allocation7 + $0x1c] sm:$0xff]
    %v1274 = vadd.f32 %v1262, %v722
    %v1275 = vadd.f32 %v1263, %v724
    %v1276 = vadd.f32 %v1264, %v726
    %v1277 = vadd.f32 %v1265, %v728
    %v1278 = vadd.f32 %v1254, %v740
    %v1279 = vadd.f32 %v1255, %v742
    %v1280 = vadd.f32 %v1256, %v744
    %v1281 = vadd.f32 %v1257, %v746
    %v1282 = vmax.f32 %v1274, %v1278
    %v1283 = vmax.f32 %v1275, %v1279
    %v1284 = vmax.f32 %v1276, %v1280
    %v1285 = vmax.f32 %v1277, %v1281
    %v1286 = vadd.f32 %v1266, %v762
    %v1287 = vadd.f32 %v1267, %v764
    %v1288 = vadd.f32 %v1268, %v766
    %v1289 = vadd.f32 %v1269, %v768
    %v1290 = vmax.f32 %v1282, %v1286
    %v1291 = vmax.f32 %v1283, %v1287
    %v1292 = vmax.f32 %v1284, %v1288
    %v1293 = vmax.f32 %v1285, %v1289
    %v1294 = vpack.c.bf16 %v1254, %v1254
    %v1295 = vpack.c.bf16 %v1255, %v1255
    %v1296 = vpack.c.bf16 %v1256, %v1256
    %v1297 = vpack.c.bf16 %v1257, %v1257
    %vm1298 = vcmask 519168
    %1299 = vst.msk [vmem:[#allocation8] sm:$0xf] %vm1298, %v1294
    %1300 = vst.msk [vmem:[#allocation8 + $0xc] sm:$0xf] %vm1298, %v1295
    %1301 = vst.msk [vmem:[#allocation8 + $0x18] sm:$0xf] %vm1298, %v1296
    %1302 = vst.msk [vmem:[#allocation8 + $0x24] sm:$0xf] %vm1298, %v1297
    %v1303 = vpack.c.bf16 %v1258, %v1258
    %v1304 = vpack.c.bf16 %v1259, %v1259
    %v1305 = vpack.c.bf16 %v1260, %v1260
    %v1306 = vpack.c.bf16 %v1261, %v1261
    %1311 = vrot.lane.b32.xlu0 %v1303, 64
    %v1312 = vpop.permute.xlu0 %1311
    %1313 = vrot.lane.b32.xlu0 %v1304, 64
    %v1314 = vpop.permute.xlu0 %1313
    %1315 = vrot.lane.b32.xlu0 %v1305, 64
    %v1316 = vpop.permute.xlu0 %1315
    %1317 = vrot.lane.b32.xlu0 %v1306, 64
    %v1318 = vpop.permute.xlu0 %1317
    %vm1323 = vcmask 1043968
    %1324 = vst.msk [vmem:[#allocation8] sm:$0xf] %vm1323, %v1312
    %1325 = vst.msk [vmem:[#allocation8 + $0xc] sm:$0xf] %vm1323, %v1314
    %1326 = vst.msk [vmem:[#allocation8 + $0x18] sm:$0xf] %vm1323, %v1316
    %1327 = vst.msk [vmem:[#allocation8 + $0x24] sm:$0xf] %vm1323, %v1318
    %v1328 = vpack.c.bf16 %v1262, %v1262
    %v1329 = vpack.c.bf16 %v1263, %v1263
    %v1330 = vpack.c.bf16 %v1264, %v1264
    %v1331 = vpack.c.bf16 %v1265, %v1265
    %1332 = vst.msk [vmem:[#allocation8 + $0x4] sm:$0xf] %vm1298, %v1328
    %1333 = vst.msk [vmem:[#allocation8 + $0x10] sm:$0xf] %vm1298, %v1329
    %1334 = vst.msk [vmem:[#allocation8 + $0x1c] sm:$0xf] %vm1298, %v1330
    %1335 = vst.msk [vmem:[#allocation8 + $0x28] sm:$0xf] %vm1298, %v1331
    %v1336 = vpack.c.bf16 %v1266, %v1266
    %v1337 = vpack.c.bf16 %v1267, %v1267
    %v1338 = vpack.c.bf16 %v1268, %v1268
    %v1339 = vpack.c.bf16 %v1269, %v1269
    %1344 = vrot.lane.b32.xlu0 %v1336, 64
    %v1345 = vpop.permute.xlu0 %1344
    %1346 = vrot.lane.b32.xlu0 %v1337, 64
    %v1347 = vpop.permute.xlu0 %1346
    %1348 = vrot.lane.b32.xlu0 %v1338, 64
    %v1349 = vpop.permute.xlu0 %1348
    %1350 = vrot.lane.b32.xlu0 %v1339, 64
    %v1351 = vpop.permute.xlu0 %1350
    %1356 = vst.msk [vmem:[#allocation8 + $0x4] sm:$0xf] %vm1323, %v1345
    %1357 = vst.msk [vmem:[#allocation8 + $0x10] sm:$0xf] %vm1323, %v1347
    %1358 = vst.msk [vmem:[#allocation8 + $0x1c] sm:$0xf] %vm1323, %v1349
    %1359 = vst.msk [vmem:[#allocation8 + $0x28] sm:$0xf] %vm1323, %v1351
    %v1360 = vpack.c.bf16 %v1270, %v1270
    %v1361 = vpack.c.bf16 %v1271, %v1271
    %v1362 = vpack.c.bf16 %v1272, %v1272
    %v1363 = vpack.c.bf16 %v1273, %v1273
    %1364 = vst.msk [vmem:[#allocation8 + $0x8] sm:$0xf] %vm1298, %v1360
    %1365 = vst.msk [vmem:[#allocation8 + $0x14] sm:$0xf] %vm1298, %v1361
    %1366 = vst.msk [vmem:[#allocation8 + $0x20] sm:$0xf] %vm1298, %v1362
    %1367 = vst.msk [vmem:[#allocation8 + $0x2c] sm:$0xf] %vm1298, %v1363
    %v1368 = vpack.c.bf16 %v1290, %v1290
    %v1369 = vpack.c.bf16 %v1291, %v1291
    %v1370 = vpack.c.bf16 %v1292, %v1292
    %v1371 = vpack.c.bf16 %v1293, %v1293
    %1376 = vrot.lane.b32.xlu0 %v1368, 64
    %v1377 = vpop.permute.xlu0 %1376
    %1378 = vrot.lane.b32.xlu0 %v1369, 64
    %v1379 = vpop.permute.xlu0 %1378
    %1380 = vrot.lane.b32.xlu0 %v1370, 64
    %v1381 = vpop.permute.xlu0 %1380
    %1382 = vrot.lane.b32.xlu0 %v1371, 64
    %v1383 = vpop.permute.xlu0 %1382
    %1388 = vst.msk [vmem:[#allocation8 + $0x8] sm:$0xf] %vm1323, %v1377
    %1389 = vst.msk [vmem:[#allocation8 + $0x14] sm:$0xf] %vm1323, %v1379
    %1390 = vst.msk [vmem:[#allocation8 + $0x20] sm:$0xf] %vm1323, %v1381
    %1391 = vst.msk [vmem:[#allocation8 + $0x2c] sm:$0xf] %vm1323, %v1383
    %v1392 = vld [vmem:[#allocation8] sm:$0xff]
    %v1393 = vld [vmem:[#allocation8 + $0x8] sm:$0xf]
    %v1394 = vld [vmem:[#allocation8 + $0xc] sm:$0xff]
    %v1395 = vld [vmem:[#allocation8 + $0x14] sm:$0xf]
    %v1396 = vld [vmem:[#allocation8 + $0x18] sm:$0xff]
    %v1397 = vld [vmem:[#allocation8 + $0x20] sm:$0xf]
    %v1398 = vld [vmem:[#allocation8 + $0x24] sm:$0xff]
    %v1399 = vld [vmem:[#allocation8 + $0x2c] sm:$0xf]
    %v1400 = vld [vmem:[%s1 + $0x120] sm:$0xff]
    %v1401 = vld [vmem:[%s1 + $0x128] sm:$0xff]
    %v1402 = vld [vmem:[%s1 + $0x130] sm:$0xff]
    %v1403 = vld [vmem:[%s1 + $0x138] sm:$0xff]
    %v1404 = vld [vmem:[%s1 + $0x140] sm:$0xff]
    %v1405 = vld [vmem:[%s1 + $0x148] sm:$0xff]
    %v1406 = vld [vmem:[%s1 + $0x150] sm:$0xff]
    %v1407 = vld [vmem:[%s1 + $0x158] sm:$0xff]
    %v1408 = vld [vmem:[%s1 + $0x160] sm:$0xff]
    %v1409 = vld [vmem:[%s1 + $0x168] sm:$0xff]
    %v1410 = vld [vmem:[%s1 + $0x170] sm:$0xff]
    %v1411 = vld [vmem:[%s1 + $0x178] sm:$0xff]
    %v1412 = vld [vmem:[%s1 + $0x180] sm:$0xff]
    %v1413 = vld [vmem:[%s1 + $0x188] sm:$0xff]
    %v1414 = vld [vmem:[%s1 + $0x190] sm:$0xff]
    %v1415 = vld [vmem:[%s1 + $0x198] sm:$0xff]
    %v1416 = vld [vmem:[%s1 + $0x1a0] sm:$0xff]
    %v1417 = vld [vmem:[%s1 + $0x1a8] sm:$0xff]
    %v1418 = vld [vmem:[%s1 + $0x1b0] sm:$0xff]
    %v1419 = vld [vmem:[%s1 + $0x1b8] sm:$0xff]
    %v1420 = vld [vmem:[%s1 + $0x1c0] sm:$0xff]
    %v1421 = vld [vmem:[%s1 + $0x1c8] sm:$0xff]
    %v1422 = vld [vmem:[%s1 + $0x1d0] sm:$0xff]
    %v1423 = vld [vmem:[%s1 + $0x1d8] sm:$0xff]
    %v1424 = vld [vmem:[%s1 + $0x1e0] sm:$0xff]
    %v1425 = vld [vmem:[%s1 + $0x1e8] sm:$0xff]
    %v1426 = vld [vmem:[%s1 + $0x1f0] sm:$0xff]
    %v1427 = vld [vmem:[%s1 + $0x1f8] sm:$0xff]
    %v1428 = vld [vmem:[%s1 + $0x200] sm:$0xff]
    %v1429 = vld [vmem:[%s1 + $0x208] sm:$0xff]
    %v1430 = vld [vmem:[%s1 + $0x210] sm:$0xff]
    %v1431 = vld [vmem:[%s1 + $0x218] sm:$0xff]
    %v1432 = vld [vmem:[%s1 + $0x220] sm:$0xff]
    %v1433 = vld [vmem:[%s1 + $0x228] sm:$0xff]
    %v1434 = vld [vmem:[%s1 + $0x230] sm:$0xff]
    %v1435 = vld [vmem:[%s1 + $0x238] sm:$0xff]
    %v1436 = vld [vmem:[%s1 + $0x240] sm:$0xff]
    %v1437 = vld [vmem:[%s1 + $0x248] sm:$0xff]
    %v1438 = vld [vmem:[%s1 + $0x250] sm:$0xff]
    %v1439 = vld [vmem:[%s1 + $0x258] sm:$0xff]
    %v1440 = vld [vmem:[%s1 + $0x260] sm:$0xff]
    %v1441 = vld [vmem:[%s1 + $0x268] sm:$0xff]
    %v1442 = vld [vmem:[%s1 + $0x270] sm:$0xff]
    %v1443 = vld [vmem:[%s1 + $0x278] sm:$0xff]
    %v1444 = vld [vmem:[%s1 + $0x280] sm:$0xff]
    %v1445 = vld [vmem:[%s1 + $0x288] sm:$0xff]
    %v1446 = vld [vmem:[%s1 + $0x290] sm:$0xff]
    %v1447 = vld [vmem:[%s1 + $0x298] sm:$0xff]
    %s1448 = scalar_lea.vmem %s2, 5
    %v1449 = vld [vmem:[%s1448] ss:$8 sm:$0x3]
    %v1451 = vperm.slane %v1449, 0
    %v1452 = vperm.slane %v1449, 1
    %v1463 = vunpack.c.l.b16 %v1392
    %v1464 = vunpack.c.h.b16 %v1392
    %v1465 = vunpack.c.l.b16 %v1393
    %v1466 = vunpack.c.l.b16 %v1394
    %v1467 = vunpack.c.h.b16 %v1394
    %v1468 = vunpack.c.l.b16 %v1395
    %v1469 = vunpack.c.l.b16 %v1396
    %v1470 = vunpack.c.h.b16 %v1396
    %v1471 = vunpack.c.l.b16 %v1397
    %v1472 = vunpack.c.l.b16 %v1398
    %v1473 = vunpack.c.h.b16 %v1398
    %v1474 = vunpack.c.l.b16 %v1399
    %v1475 = vpack.c.b16 %v1466, %v1463
    %v1476 = vpack.c.b16 %v1467, %v1464
    %v1477 = vpack.c.b16 %v1468, %v1465
    %v1478 = vpack.c.b16 %v1472, %v1469
    %v1479 = vpack.c.b16 %v1473, %v1470
    %v1480 = vpack.c.b16 %v1474, %v1471
    %v1535 = vunpack.c.l.b16 %v1400
    %v1536 = vunpack.c.h.b16 %v1400
    %v1537 = vunpack.c.l.b16 %v1401
    %v1538 = vunpack.c.h.b16 %v1401
    %v1539 = vunpack.c.l.b16 %v1402
    %v1540 = vunpack.c.h.b16 %v1402
    %v1541 = vunpack.c.l.b16 %v1403
    %v1542 = vunpack.c.h.b16 %v1403
    %v1543 = vunpack.c.l.b16 %v1404
    %v1544 = vunpack.c.h.b16 %v1404
    %v1545 = vunpack.c.l.b16 %v1405
    %v1546 = vunpack.c.h.b16 %v1405
    %v1547 = vunpack.c.l.b16 %v1406
    %v1548 = vunpack.c.h.b16 %v1406
    %v1549 = vunpack.c.l.b16 %v1407
    %v1550 = vunpack.c.h.b16 %v1407
    %v1551 = vunpack.c.l.b16 %v1408
    %v1552 = vunpack.c.h.b16 %v1408
    %v1553 = vunpack.c.l.b16 %v1409
    %v1554 = vunpack.c.h.b16 %v1409
    %v1555 = vunpack.c.l.b16 %v1410
    %v1556 = vunpack.c.h.b16 %v1410
    %v1557 = vunpack.c.l.b16 %v1411
    %v1558 = vunpack.c.h.b16 %v1411
    %v1559 = vunpack.c.l.b16 %v1412
    %v1560 = vunpack.c.h.b16 %v1412
    %v1561 = vunpack.c.l.b16 %v1413
    %v1562 = vunpack.c.h.b16 %v1413
    %v1563 = vunpack.c.l.b16 %v1414
    %v1564 = vunpack.c.h.b16 %v1414
    %v1565 = vunpack.c.l.b16 %v1415
    %v1566 = vunpack.c.h.b16 %v1415
    %v1567 = vunpack.c.l.b16 %v1416
    %v1568 = vunpack.c.h.b16 %v1416
    %v1569 = vunpack.c.l.b16 %v1417
    %v1570 = vunpack.c.h.b16 %v1417
    %v1571 = vunpack.c.l.b16 %v1418
    %v1572 = vunpack.c.h.b16 %v1418
    %v1573 = vunpack.c.l.b16 %v1419
    %v1574 = vunpack.c.h.b16 %v1419
    %v1575 = vunpack.c.l.b16 %v1420
    %v1576 = vunpack.c.h.b16 %v1420
    %v1577 = vunpack.c.l.b16 %v1421
    %v1578 = vunpack.c.h.b16 %v1421
    %v1579 = vunpack.c.l.b16 %v1422
    %v1580 = vunpack.c.h.b16 %v1422
    %v1581 = vunpack.c.l.b16 %v1423
    %v1582 = vunpack.c.h.b16 %v1423
    %v1583 = vunpack.c.l.b16 %v1424
    %v1584 = vunpack.c.h.b16 %v1424
    %v1585 = vunpack.c.l.b16 %v1425
    %v1586 = vunpack.c.h.b16 %v1425
    %v1587 = vunpack.c.l.b16 %v1426
    %v1588 = vunpack.c.h.b16 %v1426
    %v1589 = vunpack.c.l.b16 %v1427
    %v1590 = vunpack.c.h.b16 %v1427
    %v1591 = vunpack.c.l.b16 %v1428
    %v1592 = vunpack.c.h.b16 %v1428
    %v1593 = vunpack.c.l.b16 %v1429
    %v1594 = vunpack.c.h.b16 %v1429
    %v1595 = vunpack.c.l.b16 %v1430
    %v1596 = vunpack.c.h.b16 %v1430
    %v1597 = vunpack.c.l.b16 %v1431
    %v1598 = vunpack.c.h.b16 %v1431
    %v1599 = vunpack.c.l.b16 %v1432
    %v1600 = vunpack.c.h.b16 %v1432
    %v1601 = vunpack.c.l.b16 %v1433
    %v1602 = vunpack.c.h.b16 %v1433
    %v1603 = vunpack.c.l.b16 %v1434
    %v1604 = vunpack.c.h.b16 %v1434
    %v1605 = vunpack.c.l.b16 %v1435
    %v1606 = vunpack.c.h.b16 %v1435
    %v1607 = vunpack.c.l.b16 %v1436
    %v1608 = vunpack.c.h.b16 %v1436
    %v1609 = vunpack.c.l.b16 %v1437
    %v1610 = vunpack.c.h.b16 %v1437
    %v1611 = vunpack.c.l.b16 %v1438
    %v1612 = vunpack.c.h.b16 %v1438
    %v1613 = vunpack.c.l.b16 %v1439
    %v1614 = vunpack.c.h.b16 %v1439
    %v1615 = vunpack.c.l.b16 %v1440
    %v1616 = vunpack.c.h.b16 %v1440
    %v1617 = vunpack.c.l.b16 %v1441
    %v1618 = vunpack.c.h.b16 %v1441
    %v1619 = vunpack.c.l.b16 %v1442
    %v1620 = vunpack.c.h.b16 %v1442
    %v1621 = vunpack.c.l.b16 %v1443
    %v1622 = vunpack.c.h.b16 %v1443
    %v1623 = vunpack.c.l.b16 %v1444
    %v1624 = vunpack.c.h.b16 %v1444
    %v1625 = vunpack.c.l.b16 %v1445
    %v1626 = vunpack.c.h.b16 %v1445
    %v1627 = vunpack.c.l.b16 %v1446
    %v1628 = vunpack.c.h.b16 %v1446
    %v1629 = vunpack.c.l.b16 %v1447
    %v1630 = vunpack.c.h.b16 %v1447
    %v1631 = vpack.c.b16 %v1537, %v1535
    %v1632 = vpack.c.b16 %v1538, %v1536
    %v1633 = vpack.c.b16 %v1541, %v1539
    %v1634 = vpack.c.b16 %v1542, %v1540
    %v1635 = vpack.c.b16 %v1545, %v1543
    %v1636 = vpack.c.b16 %v1546, %v1544
    %v1637 = vpack.c.b16 %v1549, %v1547
    %v1638 = vpack.c.b16 %v1550, %v1548
    %v1639 = vpack.c.b16 %v1553, %v1551
    %v1640 = vpack.c.b16 %v1554, %v1552
    %v1641 = vpack.c.b16 %v1557, %v1555
    %v1642 = vpack.c.b16 %v1558, %v1556
    %v1643 = vpack.c.b16 %v1561, %v1559
    %v1644 = vpack.c.b16 %v1562, %v1560
    %v1645 = vpack.c.b16 %v1565, %v1563
    %v1646 = vpack.c.b16 %v1566, %v1564
    %v1647 = vpack.c.b16 %v1569, %v1567
    %v1648 = vpack.c.b16 %v1570, %v1568
    %v1649 = vpack.c.b16 %v1573, %v1571
    %v1650 = vpack.c.b16 %v1574, %v1572
    %v1651 = vpack.c.b16 %v1577, %v1575
    %v1652 = vpack.c.b16 %v1578, %v1576
    %v1653 = vpack.c.b16 %v1581, %v1579
    %v1654 = vpack.c.b16 %v1582, %v1580
    %v1655 = vpack.c.b16 %v1585, %v1583
    %v1656 = vpack.c.b16 %v1586, %v1584
    %v1657 = vpack.c.b16 %v1589, %v1587
    %v1658 = vpack.c.b16 %v1590, %v1588
    %v1659 = vpack.c.b16 %v1593, %v1591
    %v1660 = vpack.c.b16 %v1594, %v1592
    %v1661 = vpack.c.b16 %v1597, %v1595
    %v1662 = vpack.c.b16 %v1598, %v1596
    %v1663 = vpack.c.b16 %v1601, %v1599
    %v1664 = vpack.c.b16 %v1602, %v1600
    %v1665 = vpack.c.b16 %v1605, %v1603
    %v1666 = vpack.c.b16 %v1606, %v1604
    %v1667 = vpack.c.b16 %v1609, %v1607
    %v1668 = vpack.c.b16 %v1610, %v1608
    %v1669 = vpack.c.b16 %v1613, %v1611
    %v1670 = vpack.c.b16 %v1614, %v1612
    %v1671 = vpack.c.b16 %v1617, %v1615
    %v1672 = vpack.c.b16 %v1618, %v1616
    %v1673 = vpack.c.b16 %v1621, %v1619
    %v1674 = vpack.c.b16 %v1622, %v1620
    %v1675 = vpack.c.b16 %v1625, %v1623
    %v1676 = vpack.c.b16 %v1626, %v1624
    %v1677 = vpack.c.b16 %v1629, %v1627
    %v1678 = vpack.c.b16 %v1630, %v1628
    %1727 = vmatpush.bf16.msra.mxu0 %v1645
    %1728 = vmatpush.bf16.msra.mxu0 %v1643
    %1729 = vmatpush.bf16.msra.mxu0 %v1641
    %1730 = vmatpush.bf16.msra.mxu0 %v1639
    %1731 = vmatpush.bf16.msra.mxu0 %v1637
    %1732 = vmatpush.bf16.msra.mxu0 %v1635
    %1733 = vmatpush.bf16.msra.mxu0 %v1633
    %1734 = vmatpush.bf16.msra.mxu0 %v1631
    %1735 = vmatmul.bf16.gmra.mxu0 %v1475
    %v1736 = vpop.f32.mrf.mxu0
    %v1737 = vadd.f32 %v1451, %v1736
    %v1738 = vpop.f32.mrf.mxu0
    %v1739 = vadd.f32 %v1451, %v1738
    %1740 = vmatmul.bf16.gmra.mxu0 %v1478
    %v1741 = vpop.f32.mrf.mxu0
    %v1742 = vadd.f32 %v1451, %v1741
    %v1743 = vpop.f32.mrf.mxu0
    %v1744 = vadd.f32 %v1451, %v1743
    %1745 = vdwg.mxu0
    %1746 = vmatpush.bf16.msra.mxu0 %v1661
    %1747 = vmatpush.bf16.msra.mxu0 %v1659
    %1748 = vmatpush.bf16.msra.mxu0 %v1657
    %1749 = vmatpush.bf16.msra.mxu0 %v1655
    %1750 = vmatpush.bf16.msra.mxu0 %v1653
    %1751 = vmatpush.bf16.msra.mxu0 %v1651
    %1752 = vmatpush.bf16.msra.mxu0 %v1649
    %1753 = vmatpush.bf16.msra.mxu0 %v1647
    %1754 = vmatmul.bf16.gmra.mxu0 %v1476
    %v1755 = vpop.f32.mrf.mxu0
    %v1756 = vadd.f32 %v1737, %v1755
    %v1757 = vpop.f32.mrf.mxu0
    %v1758 = vadd.f32 %v1739, %v1757
    %1759 = vmatmul.bf16.gmra.mxu0 %v1479
    %v1760 = vpop.f32.mrf.mxu0
    %v1761 = vadd.f32 %v1742, %v1760
    %v1762 = vpop.f32.mrf.mxu0
    %v1763 = vadd.f32 %v1744, %v1762
    %1764 = vdwg.mxu0
    %1765 = vmatpush.bf16.msra.mxu0 %v1677
    %1766 = vmatpush.bf16.msra.mxu0 %v1675
    %1767 = vmatpush.bf16.msra.mxu0 %v1673
    %1768 = vmatpush.bf16.msra.mxu0 %v1671
    %1769 = vmatpush.bf16.msra.mxu0 %v1669
    %1770 = vmatpush.bf16.msra.mxu0 %v1667
    %1771 = vmatpush.bf16.msra.mxu0 %v1665
    %1772 = vmatpush.bf16.msra.mxu0 %v1663
    %1773 = vmatmul.bf16.gmra.mxu0 %v1477
    %v1774 = vpop.f32.mrf.mxu0
    %v1775 = vadd.f32 %v1756, %v1774
    %v1776 = vpop.f32.mrf.mxu0
    %v1777 = vadd.f32 %v1758, %v1776
    %1778 = vmatmul.bf16.gmra.mxu0 %v1480
    %v1779 = vpop.f32.mrf.mxu0
    %v1780 = vadd.f32 %v1761, %v1779
    %v1781 = vpop.f32.mrf.mxu0
    %v1782 = vadd.f32 %v1763, %v1781
    %1783 = vdwg.mxu0
    %1784 = vmatpush.bf16.msra.mxu0 %v1646
    %1785 = vmatpush.bf16.msra.mxu0 %v1644
    %1786 = vmatpush.bf16.msra.mxu0 %v1642
    %1787 = vmatpush.bf16.msra.mxu0 %v1640
    %1788 = vmatpush.bf16.msra.mxu0 %v1638
    %1789 = vmatpush.bf16.msra.mxu0 %v1636
    %1790 = vmatpush.bf16.msra.mxu0 %v1634
    %1791 = vmatpush.bf16.msra.mxu0 %v1632
    %1792 = vmatmul.bf16.gmra.mxu0 %v1475
    %v1793 = vpop.f32.mrf.mxu0
    %v1794 = vadd.f32 %v1452, %v1793
    %v1795 = vpop.f32.mrf.mxu0
    %v1796 = vadd.f32 %v1452, %v1795
    %1797 = vmatmul.bf16.gmra.mxu0 %v1478
    %v1798 = vpop.f32.mrf.mxu0
    %v1799 = vadd.f32 %v1452, %v1798
    %v1800 = vpop.f32.mrf.mxu0
    %v1801 = vadd.f32 %v1452, %v1800
    %1802 = vdwg.mxu0
    %1803 = vmatpush.bf16.msra.mxu0 %v1662
    %1804 = vmatpush.bf16.msra.mxu0 %v1660
    %1805 = vmatpush.bf16.msra.mxu0 %v1658
    %1806 = vmatpush.bf16.msra.mxu0 %v1656
    %1807 = vmatpush.bf16.msra.mxu0 %v1654
    %1808 = vmatpush.bf16.msra.mxu0 %v1652
    %1809 = vmatpush.bf16.msra.mxu0 %v1650
    %1810 = vmatpush.bf16.msra.mxu0 %v1648
    %1811 = vmatmul.bf16.gmra.mxu0 %v1476
    %v1812 = vpop.f32.mrf.mxu0
    %v1813 = vadd.f32 %v1794, %v1812
    %v1814 = vpop.f32.mrf.mxu0
    %v1815 = vadd.f32 %v1796, %v1814
    %1816 = vmatmul.bf16.gmra.mxu0 %v1479
    %v1817 = vpop.f32.mrf.mxu0
    %v1818 = vadd.f32 %v1799, %v1817
    %v1819 = vpop.f32.mrf.mxu0
    %v1820 = vadd.f32 %v1801, %v1819
    %1821 = vdwg.mxu0
    %1822 = vmatpush.bf16.msra.mxu0 %v1678
    %1823 = vmatpush.bf16.msra.mxu0 %v1676
    %1824 = vmatpush.bf16.msra.mxu0 %v1674
    %1825 = vmatpush.bf16.msra.mxu0 %v1672
    %1826 = vmatpush.bf16.msra.mxu0 %v1670
    %1827 = vmatpush.bf16.msra.mxu0 %v1668
    %1828 = vmatpush.bf16.msra.mxu0 %v1666
    %1829 = vmatpush.bf16.msra.mxu0 %v1664
    %1830 = vmatmul.bf16.gmra.mxu0 %v1477
    %v1831 = vpop.f32.mrf.mxu0
    %v1832 = vadd.f32 %v1813, %v1831
    %v1833 = vpop.f32.mrf.mxu0
    %v1834 = vadd.f32 %v1815, %v1833
    %1835 = vmatmul.bf16.gmra.mxu0 %v1480
    %v1836 = vpop.f32.mrf.mxu0
    %v1837 = vadd.f32 %v1818, %v1836
    %v1838 = vpop.f32.mrf.mxu0
    %v1839 = vadd.f32 %v1820, %v1838
    %1840 = vdwg.mxu0
    %v1841 = vmax.f32 %v1775, 0.0
    %v1842 = vmax.f32 %v1777, 0.0
    %v1843 = vmax.f32 %v1780, 0.0
    %v1844 = vmax.f32 %v1782, 0.0
    %v1845 = vld [vmem:[%s1 + $0x440] sm:$0x1]
    %v1846 = vpack.c.bf16 %v1842, %v1841
    %v1847 = vpack.c.bf16 %v1844, %v1843
    %v1849 = vsel %vm96, %v1845, 0
    %1851 = vmatpush.bf16.msra.mxu0 0
    %1852 = vmatpush.bf16.msra.mxu0 0
    %1853 = vmatpush.bf16.msra.mxu0 0
    %1854 = vmatpush.bf16.msra.mxu0 0
    %1855 = vmatpush.bf16.msra.mxu0 0
    %1856 = vmatpush.bf16.msra.mxu0 0
    %1857 = vmatpush.bf16.msra.mxu0 %v1847
    %1858 = vmatpush.bf16.msra.mxu0 %v1846
    %1859 = vmatmul.bf16.gmra.mxu0 %v1849
    %v1860 = vpop.f32.mrf.mxu0
    %v1861 = vadd.f32 0.0, %v1860
    %v1862 = vpop.f32.mrf.mxu0
    %1863 = vdwg.mxu0
    %v1864 = vmul.f32 %v1861, 0.07692308
    %v1865 = vpack.c.bf16 %v1864, %v1864
    %v1866 = vld [vmem:[%s1 + $0x2f0] sm:$0xf]
    %v1867 = vld [vmem:[%s1 + $0x2f8] sm:$0xf]
    %v1868 = vld [vmem:[%s1 + $0x300] sm:$0xf]
    %v1869 = vld [vmem:[%s1 + $0x308] sm:$0xf]
    %v1870 = vld [vmem:[%s1 + $0x310] sm:$0xf]
    %v1871 = vld [vmem:[%s1 + $0x318] sm:$0xf]
    %v1872 = vld [vmem:[%s1 + $0x320] sm:$0xf]
    %v1873 = vld [vmem:[%s1 + $0x328] sm:$0xf]
    %v1874 = vld [vmem:[%s1 + $0x330] sm:$0xf]
    %v1875 = vld [vmem:[%s1 + $0x338] sm:$0xf]
    %v1876 = vld [vmem:[%s1 + $0x340] sm:$0xf]
    %v1877 = vld [vmem:[%s1 + $0x348] sm:$0xf]
    %v1878 = vld [vmem:[%s1 + $0x350] sm:$0xf]
    %v1879 = vld [vmem:[%s1 + $0x358] sm:$0xf]
    %v1880 = vld [vmem:[%s1 + $0x360] sm:$0xf]
    %v1881 = vld [vmem:[%s1 + $0x368] sm:$0xf]
    %v1882 = vld [vmem:[%s2 + $0x6] ss:$0 sm:$0xff]
    %v1899 = vunpack.c.l.b16 %v1866
    %v1900 = vunpack.c.l.b16 %v1867
    %v1901 = vunpack.c.l.b16 %v1868
    %v1902 = vunpack.c.l.b16 %v1869
    %v1903 = vunpack.c.l.b16 %v1870
    %v1904 = vunpack.c.l.b16 %v1871
    %v1905 = vunpack.c.l.b16 %v1872
    %v1906 = vunpack.c.l.b16 %v1873
    %v1907 = vunpack.c.l.b16 %v1874
    %v1908 = vunpack.c.l.b16 %v1875
    %v1909 = vunpack.c.l.b16 %v1876
    %v1910 = vunpack.c.l.b16 %v1877
    %v1911 = vunpack.c.l.b16 %v1878
    %v1912 = vunpack.c.l.b16 %v1879
    %v1913 = vunpack.c.l.b16 %v1880
    %v1914 = vunpack.c.l.b16 %v1881
    %v1915 = vpack.c.b16 %v1900, %v1899
    %v1916 = vpack.c.b16 %v1902, %v1901
    %v1917 = vpack.c.b16 %v1904, %v1903
    %v1918 = vpack.c.b16 %v1906, %v1905
    %v1919 = vpack.c.b16 %v1908, %v1907
    %v1920 = vpack.c.b16 %v1910, %v1909
    %v1921 = vpack.c.b16 %v1912, %v1911
    %v1922 = vpack.c.b16 %v1914, %v1913
    %1931 = vmatpush.bf16.msra.mxu0 %v1922
    %1932 = vmatpush.bf16.msra.mxu0 %v1921
    %1933 = vmatpush.bf16.msra.mxu0 %v1920
    %1934 = vmatpush.bf16.msra.mxu0 %v1919
    %1935 = vmatpush.bf16.msra.mxu0 %v1918
    %1936 = vmatpush.bf16.msra.mxu0 %v1917
    %1937 = vmatpush.bf16.msra.mxu0 %v1916
    %1938 = vmatpush.bf16.msra.mxu0 %v1915
    %1939 = vmatmul.bf16.gmra.mxu0 %v1865
    %v1940 = vpop.f32.mrf.mxu0
    %v1941 = vadd.f32 %v1882, %v1940
    %v1942 = vpop.f32.mrf.mxu0
    %1943 = vdwg.mxu0
    %v1944 = vmax.f32 %v1941, 0.0
    %v1945 = vpack.c.bf16 %v1944, %v1944
    %v1946 = vld [vmem:[%s1 + $0x370] sm:$0xf]
    %v1947 = vld [vmem:[%s2 + $0x7] ss:$0 sm:$0xff]
    %vm1948 = vcmask 64512
    %v1950 = vsel %vm1948, %v1945, 0
    %vm1952 = vcmask 1043456
    %v1954 = vsel %vm1952, %v1946, 0
    %1956 = vmatpush.bf16.msra.mxu0 0
    %1957 = vmatpush.bf16.msra.mxu0 0
    %1958 = vmatpush.bf16.msra.mxu0 0
    %1959 = vmatpush.bf16.msra.mxu0 0
    %1960 = vmatpush.bf16.msra.mxu0 0
    %1961 = vmatpush.bf16.msra.mxu0 0
    %1962 = vmatpush.bf16.msra.mxu0 0
    %1963 = vmatpush.bf16.msra.mxu0 %v1954
    %1964 = vmatmul.bf16.gmra.mxu0 %v1950
    %v1965 = vpop.f32.mrf.mxu0
    %v1966 = vadd.f32 %v1947, %v1965
    %v1967 = vpop.f32.mrf.mxu0
    %1968 = vdwg.mxu0
    %v1969 = vsub.f32 0.0, %v1966
    %v1970 = vmul.f32 %v1969, 1.442695
    %v1971 = vpow.pop %v1970
    %v1972 = vadd.f32 %v1971, 1.0
    %v1973 = vrcp.pop %v1972
    %v1974 = vmul.f32 %v1972, %v1973
    %v1975 = vsub.f32 1.0, %v1974
    %v1976 = vmul.f32 %v1973, %v1975
    %v1977 = vadd.f32 %v1973, %v1976
    %vm1978 = vweird.f32 %v1972
    %vm1979 = vweird.f32 %v1973
    %vm1980 = vmor %vm1978, %vm1979
    %v1981 = vsel %vm1980, %v1973, %v1977
    %v1982 = vand.u32 2147483647, %v1972
    %vm1983 = vcmp.eq.f32.partialorder %v1982, 8.507059e+37
    %v1984 = vand.u32 %v1972, 2147483648
    %v1985 = vor.u32 1.1754944e-38, %v1984
    %v1986 = vsel %vm1983, %v1985, %v1981
    %v1987 = vmul.f32 1.0, %v1986
    %v1988 = vld [vmem:[%s1 + $0x450] sm:$0xf]
    %v1989 = vld [vmem:[%s1 + $0x458] sm:$0xf]
    %v1990 = vld [vmem:[%s1 + $0x460] sm:$0xf]
    %v1991 = vld [vmem:[%s1 + $0x468] sm:$0xf]
    %v1992 = vpack.c.bf16 %v1987, %v1987
    %v1997 = vunpack.c.l.b16 %v1988
    %v1998 = vunpack.c.l.b16 %v1989
    %v1999 = vunpack.c.l.b16 %v1990
    %v2000 = vunpack.c.l.b16 %v1991
    %v2001 = vpack.c.b16 %v1998, %v1997
    %v2002 = vpack.c.b16 %v2000, %v1999
    %v2004 = vsel %vm1192, %v2001, 0
    %v2007 = vsel %vm1192, %v2002, 0
    %v2010 = vsel %vm1199, %v1992, 0
    %2012 = vmatpush.bf16.msra.mxu0 0
    %2013 = vmatpush.bf16.msra.mxu0 0
    %2014 = vmatpush.bf16.msra.mxu0 0
    %2015 = vmatpush.bf16.msra.mxu0 0
    %2016 = vmatpush.bf16.msra.mxu0 0
    %2017 = vmatpush.bf16.msra.mxu0 0
    %2018 = vmatpush.bf16.msra.mxu0 0
    %2019 = vmatpush.bf16.msra.mxu0 %v2010
    %2020 = vmatmul.bf16.gmra.mxu0 %v2004
    %v2021 = vpop.f32.mrf.mxu0
    %v2022 = vadd.f32 0.0, %v2021
    %v2023 = vpop.f32.mrf.mxu0
    %v2024 = vadd.f32 0.0, %v2023
    %2025 = vmatmul.bf16.gmra.mxu0 %v2007
    %v2026 = vpop.f32.mrf.mxu0
    %v2027 = vadd.f32 0.0, %v2026
    %v2028 = vpop.f32.mrf.mxu0
    %v2029 = vadd.f32 0.0, %v2028
    %2030 = vdwg.mxu0
    %v2031 = vmul.f32 %v1841, %v2022
    %v2032 = vmul.f32 %v1842, %v2024
    %v2033 = vmul.f32 %v1843, %v2027
    %v2034 = vmul.f32 %v1844, %v2029
    %v2035 = vadd.f32 %v2031, %v1832
    %v2036 = vadd.f32 %v2032, %v1834
    %v2037 = vadd.f32 %v2033, %v1837
    %v2038 = vadd.f32 %v2034, %v1839
    %v2039 = vsel %vm682, %v2035, 0.0
    %v2040 = vsel %vm683, %v2036, 0.0
    %v2041 = vsel %vm684, %v2037, 0.0
    %v2042 = vsel %vm685, %v2038, 0.0
    %v2043 = vpack.c.bf16 %v2040, %v2039
    %v2044 = vpack.c.bf16 %v2042, %v2041
    %2045 = vmatpush.bf16.msra.mxu0 0
    %2046 = vmatpush.bf16.msra.mxu0 0
    %2047 = vmatpush.bf16.msra.mxu0 0
    %2048 = vmatpush.bf16.msra.mxu0 0
    %2049 = vmatpush.bf16.msra.mxu0 0
    %2050 = vmatpush.bf16.msra.mxu0 0
    %2051 = vmatpush.bf16.msra.mxu0 %v2044
    %2052 = vmatpush.bf16.msra.mxu0 %v2043
    %2053 = vmatmul.bf16.gmra.mxu0 %v1849
    %v2054 = vpop.f32.mrf.mxu0
    %v2055 = vadd.f32 0.0, %v2054
    %v2056 = vpop.f32.mrf.mxu0
    %2057 = vdwg.mxu0
    %v2058 = vmul.f32 %v2055, 0.07692308
    %v2059 = vpack.c.bf16 %v2058, %v2058
    %v2060 = vld [vmem:[%s1 + $0x380] sm:$0xf]
    %v2061 = vld [vmem:[%s1 + $0x388] sm:$0xf]
    %v2062 = vld [vmem:[%s1 + $0x390] sm:$0xf]
    %v2063 = vld [vmem:[%s1 + $0x398] sm:$0xf]
    %v2064 = vld [vmem:[%s1 + $0x3a0] sm:$0xf]
    %v2065 = vld [vmem:[%s1 + $0x3a8] sm:$0xf]
    %v2066 = vld [vmem:[%s1 + $0x3b0] sm:$0xf]
    %v2067 = vld [vmem:[%s1 + $0x3b8] sm:$0xf]
    %v2068 = vld [vmem:[%s1 + $0x3c0] sm:$0xf]
    %v2069 = vld [vmem:[%s1 + $0x3c8] sm:$0xf]
    %v2070 = vld [vmem:[%s1 + $0x3d0] sm:$0xf]
    %v2071 = vld [vmem:[%s1 + $0x3d8] sm:$0xf]
    %v2072 = vld [vmem:[%s1 + $0x3e0] sm:$0xf]
    %v2073 = vld [vmem:[%s1 + $0x3e8] sm:$0xf]
    %v2074 = vld [vmem:[%s1 + $0x3f0] sm:$0xf]
    %v2075 = vld [vmem:[%s1 + $0x3f8] sm:$0xf]
    %v2076 = vld [vmem:[%s2 + $0x10] ss:$0 sm:$0xff]
    %v2093 = vunpack.c.l.b16 %v2060
    %v2094 = vunpack.c.l.b16 %v2061
    %v2095 = vunpack.c.l.b16 %v2062
    %v2096 = vunpack.c.l.b16 %v2063
    %v2097 = vunpack.c.l.b16 %v2064
    %v2098 = vunpack.c.l.b16 %v2065
    %v2099 = vunpack.c.l.b16 %v2066
    %v2100 = vunpack.c.l.b16 %v2067
    %v2101 = vunpack.c.l.b16 %v2068
    %v2102 = vunpack.c.l.b16 %v2069
    %v2103 = vunpack.c.l.b16 %v2070
    %v2104 = vunpack.c.l.b16 %v2071
    %v2105 = vunpack.c.l.b16 %v2072
    %v2106 = vunpack.c.l.b16 %v2073
    %v2107 = vunpack.c.l.b16 %v2074
    %v2108 = vunpack.c.l.b16 %v2075
    %v2109 = vpack.c.b16 %v2094, %v2093
    %v2110 = vpack.c.b16 %v2096, %v2095
    %v2111 = vpack.c.b16 %v2098, %v2097
    %v2112 = vpack.c.b16 %v2100, %v2099
    %v2113 = vpack.c.b16 %v2102, %v2101
    %v2114 = vpack.c.b16 %v2104, %v2103
    %v2115 = vpack.c.b16 %v2106, %v2105
    %v2116 = vpack.c.b16 %v2108, %v2107
    %2125 = vmatpush.bf16.msra.mxu0 %v2116
    %2126 = vmatpush.bf16.msra.mxu0 %v2115
    %2127 = vmatpush.bf16.msra.mxu0 %v2114
    %2128 = vmatpush.bf16.msra.mxu0 %v2113
    %2129 = vmatpush.bf16.msra.mxu0 %v2112
    %2130 = vmatpush.bf16.msra.mxu0 %v2111
    %2131 = vmatpush.bf16.msra.mxu0 %v2110
    %2132 = vmatpush.bf16.msra.mxu0 %v2109
    %2133 = vmatmul.bf16.gmra.mxu0 %v2059
    %v2134 = vpop.f32.mrf.mxu0
    %v2135 = vadd.f32 %v2076, %v2134
    %v2136 = vpop.f32.mrf.mxu0
    %2137 = vdwg.mxu0
    %v2138 = vmax.f32 %v2135, 0.0
    %v2139 = vpack.c.bf16 %v2138, %v2138
    %v2140 = vld [vmem:[%s1 + $0x400] sm:$0xf]
    %v2141 = vld [vmem:[%s1 + $0x408] sm:$0xf]
    %v2142 = vld [vmem:[%s1 + $0x410] sm:$0xf]
    %v2143 = vld [vmem:[%s1 + $0x418] sm:$0xf]
    %v2144 = vld [vmem:[%s1 + $0x420] sm:$0xf]
    %v2145 = vld [vmem:[%s1 + $0x428] sm:$0xf]
    %v2146 = vld [vmem:[%s1 + $0x430] sm:$0xf]
    %v2147 = vld [vmem:[%s1 + $0x438] sm:$0xf]
    %v2148 = vld [vmem:[%s2 + $0x11] ss:$0 sm:$0xff]
    %v2157 = vunpack.c.l.b16 %v2140
    %v2158 = vunpack.c.l.b16 %v2141
    %v2159 = vunpack.c.l.b16 %v2142
    %v2160 = vunpack.c.l.b16 %v2143
    %v2161 = vunpack.c.l.b16 %v2144
    %v2162 = vunpack.c.l.b16 %v2145
    %v2163 = vunpack.c.l.b16 %v2146
    %v2164 = vunpack.c.l.b16 %v2147
    %v2165 = vpack.c.b16 %v2158, %v2157
    %v2166 = vpack.c.b16 %v2160, %v2159
    %v2167 = vpack.c.b16 %v2162, %v2161
    %v2168 = vpack.c.b16 %v2164, %v2163
    %v2174 = vsel %vm102, %v2139, 0
    %2176 = vmatpush.bf16.msra.mxu0 0
    %2177 = vmatpush.bf16.msra.mxu0 0
    %2178 = vmatpush.bf16.msra.mxu0 0
    %2179 = vmatpush.bf16.msra.mxu0 0
    %2180 = vmatpush.bf16.msra.mxu0 %v2168
    %2181 = vmatpush.bf16.msra.mxu0 %v2167
    %2182 = vmatpush.bf16.msra.mxu0 %v2166
    %2183 = vmatpush.bf16.msra.mxu0 %v2165
    %2184 = vmatmul.bf16.gmra.mxu0 %v2174
    %v2185 = vpop.f32.mrf.mxu0
    %v2186 = vadd.f32 %v2148, %v2185
    %v2187 = vpop.f32.mrf.mxu0
    %2188 = vdwg.mxu0
    %vm2189 = vcmask 9216
    %v2190 = vsel %vm2189, %v2186, -inf
    %2191 = vmax.xlane.f32.xlu0 %v2190
    %v2192 = vpop.xlane.xlu0 %2191
    %v2193 = vsub.f32 %v2186, %v2192
    %v2194 = vmul.f32 %v2193, 1.442695
    %v2195 = vpow.pop %v2194
    %v2196 = vsel %vm2189, %v2195, 0.0
    %2197 = vadd.xlane.f32.xlu0 %v2196
    %v2198 = vpop.xlane.xlu0 %2197
    %v2199 = vlog2.pop %v2198
    %v2200 = vmul.f32 %v2199, 0.6931472
    %v2201 = vsub.f32 %v2193, %v2200
    %2202 = vst.msk [vmem:[#allocation9] sm:$0x3] %vm2189, %v2201
    // Predicated region
    $region14: #{forward.1} parent=1 // pred_check
      _
    $region15: #{forward.1} parent=1 // pred_check_branch
      %2204 = sbr.rel (0) target = $region17
    $region16: #{forward.1} parent=1 // pred_region
      %2206 = vsyncadd [#allocation10], 0
      %s2208 = sshll.u32 [#allocation9], 4
      %s2209 = int_to_ptr.vmem [resolvable:$true] %s2208
      %s2210 = sshll.u32 %s3, 4
      %s2211 = int_to_ptr.hbm [resolvable:$true] %s2210
      %2213 = dma.vmem_to_hbm [thread:$0]  %s2209, 32, %s2211, [#allocation10]
    $region17: #{forward.1} parent=1 // pred_fallthru
      _
    // Predicated region
    $region18: #{forward.1} parent=1 // pred_check
      _
    $region19: #{forward.1} parent=1 // pred_check_branch
      %2215 = sbr.rel (0) target = $region21
    $region20: #{forward.1} parent=1 // pred_region
      %2217 = dma.done [#allocation10], 32
    $region21: #{forward.1} parent=1 // pred_fallthru
      _
    %2218 = vsyncpa [#allocation10], 1

</llo_original>
